<compile_context>
chip_gen: v5e
topology: v5e:2x2
jax: 0.10.0
libtpu: 0.0.40
codegen_flags: <defaults>
</compile_context>

<pallas_src>
import functools

import jax
import jax.numpy as jnp
from jax.experimental import pallas as pl
from jax.experimental.pallas import tpu as pltpu


# ----------------------------------------------------------------------------
# small math helpers (shared by the kernels and the pure-JAX reference)
# ----------------------------------------------------------------------------
def _silu(x):
    return x * (1.0 / (1.0 + jnp.exp(-x)))


def _gelu(x):  # exact (erf) form == torch.nn.GELU default
    return 0.5 * x * (1.0 + jax.lax.erf(x * 0.7071067811865476))


def _layernorm(x, g, b, eps=1e-5):
    mu = jnp.mean(x, axis=-1, keepdims=True)
    var = jnp.mean((x - mu) * (x - mu), axis=-1, keepdims=True)
    return (x - mu) * jax.lax.rsqrt(var + eps) * g + b


def _softmax(x, axis):
    m = jnp.max(x, axis=axis, keepdims=True)
    e = jnp.exp(x - m)
    return e / jnp.sum(e, axis=axis, keepdims=True)


def _round_up(x, m):
    return (x + m - 1) // m * m


# ----------------------------------------------------------------------------
# Kernel 1: LayerNorm(dim) + q/k/v projections + per-head l2norm (row parallel)
# ----------------------------------------------------------------------------
def _qkv_kernel(x_ref, g_ref, wq_ref, wk_ref, wv_ref, qn_ref, kn_ref, v_ref,
                *, heads, dim_head, mxu_dtype):
    f32 = jnp.float32
    x = x_ref[...].astype(f32)                       # [tm, D]
    g = g_ref[...].astype(f32)                       # [1, D]
    xh = _layernorm(x, g, 0.0)                       # module LayerNorm: beta buffer == 0
    xm = xh.astype(mxu_dtype)

    q = jnp.dot(xm, wq_ref[...].astype(mxu_dtype), preferred_element_type=f32)
    k = jnp.dot(xm, wk_ref[...].astype(mxu_dtype), preferred_element_type=f32)
    v = jnp.dot(xm, wv_ref[...].astype(mxu_dtype), preferred_element_type=f32)

    def l2norm_heads(t):                             # F.normalize per head (eps 1e-12)
        cols = []
        for h in range(heads):
            th = t[:, h * dim_head:(h + 1) * dim_head]
            ss = jnp.sum(th * th, axis=-1, keepdims=True)
            inv = 1.0 / jnp.maximum(jnp.sqrt(ss), 1e-12)
            cols.append(th * inv)
        return jnp.concatenate(cols, axis=-1)

    qn_ref[...] = l2norm_heads(q).astype(qn_ref.dtype)
    kn_ref[...] = l2norm_heads(k).astype(kn_ref.dtype)
    v_ref[...] = v.astype(v_ref.dtype)


# ----------------------------------------------------------------------------
# Kernel 2: position-bias MLP + attention + coordinate update, per (batch, i-tile)
# ----------------------------------------------------------------------------
def _attn_coors_kernel(
        q_ref, k_ref, v_ref, ci_ref, cjt_ref,
        srow_ref, svec_ref,
        wp1_ref, wp2_ref, wqk_ref, wc1_ref, wc2_ref, wg_ref,
        wvph_ref, woh_ref,
        out_ref, cout_ref,
        *, heads, dim_head, scale, offs, mxu_dtype, approx_recip):
    f32 = jnp.float32
    dh = dim_head
    hd = heads * dh
    n = k_ref.shape[2]
    pd = wp1_ref.shape[0]
    ch = wc1_ref.shape[1]
    out_dim = out_ref.shape[2]

    qh = q_ref[0]                      # [H, ti, dh] (already in MXU dtype)
    kh = k_ref[0]                      # [H, n,  dh]
    vh = v_ref[0]                      # [H, n,  dh]
    ci = ci_ref[0].astype(f32)         # [ti, 3]    query-row coordinates
    cjt = cjt_ref[0].astype(f32)       # [3, n]     all coordinates (transposed)
    srow = srow_ref[...].astype(f32)   # [1, K]     packed tiny params
    svec = svec_ref[...].astype(f32)   # [1, hd+dim]  (bvp ++ bo)
    wp1 = wp1_ref[...].astype(f32)
    wp2 = wp2_ref[...].astype(f32)
    wqk = wqk_ref[...].astype(f32)
    wc1 = wc1_ref[...].astype(f32)
    wc2 = wc2_ref[...].astype(f32)
    wg = wg_ref[...].astype(f32)
    wvph = wvph_ref[...]               # [H, pd, dh]
    woh = woh_ref[...]                 # [H, dh, dim]

    def sc(name, idx):                 # packed tiny scalar -> [1, 1] (broadcasts)
        o = offs[name] + idx
        return srow[:, o:o + 1]

    def recip(x):
        return pl.reciprocal(x, approx=approx_recip)

    def mix(planes, w, n_out, bias_name):
        # out[q] = sum_p planes[p] * w[p, q] (+ bias[q]); small channel counts only.
        outs = []
        for q_ in range(n_out):
            acc = planes[0] * w[0:1, q_:q_ + 1]
            for p_ in range(1, len(planes)):
                acc = acc + planes[p_] * w[p_:p_ + 1, q_:q_ + 1]
            if bias_name is not None:
                acc = acc + sc(bias_name, q_)
            outs.append(acc)
        return outs

    def ln_silu(planes, g_name, b_name):
        # LayerNorm across the channel (plane) axis, then SiLU; all lane-dense [ti, n].
        k_ = float(len(planes))
        mu = planes[0]
        for t in planes[1:]:
            mu = mu + t
        mu = mu * (1.0 / k_)
        cent = [t - mu for t in planes]
        var = cent[0] * cent[0]
        for t in cent[1:]:
            var = var + t * t
        var = var * (1.0 / k_)
        rstd = jax.lax.rsqrt(var + 1e-5)
        return [_silu(c * rstd * sc(g_name, p_) + sc(b_name, p_))
                for p_, c in enumerate(cent)]

    # --- relative coordinates / distances (j on lanes) ------------------------
    rel = [ci[:, c:c + 1] - cjt[c:c + 1, :] for c in range(3)]      # 3 x [ti, n]
    dist = jnp.sqrt(rel[0] * rel[0] + rel[1] * rel[1] + rel[2] * rel[2])

    # --- DynamicPositionBias MLP: (Linear -> LayerNorm -> SiLU) x 3 -----------
    pos = -100.0 * dist
    hp = [pos * sc("wp0", p_) + sc("bp0", p_) for p_ in range(pd)]  # Linear(1, pd)
    hp = ln_silu(hp, "lg0", "lb0")
    hp = ln_silu(mix(hp, wp1, pd, "bp1"), "lg1", "lb1")
    hp = ln_silu(mix(hp, wp2, pd, "bp2"), "lg2", "lb2")             # pd x [ti, n]

    # qk_pos head of the MLP (per attention head, lane-dense over j)
    qk_pos = mix(hp, wqk, heads, "bqk")                             # H x [ti, n]

    # --- cosine-sim logits: qk_h = scale * q_h @ k_h^T + qk_pos_h (MXU) -------
    qk = []
    for h in range(heads):
        sim_h = jax.lax.dot_general(
            qh[h].astype(mxu_dtype), kh[h].astype(mxu_dtype),
            (((1,), (1,)), ((), ())), preferred_element_type=f32)   # [ti, n]
        qk.append(scale * sim_h + qk_pos[h])

    # --- coordinate branch -----------------------------------------------------
    cw = mix([_gelu(t) for t in mix(qk, wc1, ch, None)], wc2, heads, None)
    gate = [jnp.tanh(t) for t in mix(qk, wg, heads, "bg")]
    wcomb = None
    for h in range(heads):
        m = jnp.max(cw[h], axis=-1, keepdims=True)
        e = jnp.exp(cw[h] - m)
        ca_h = e * recip(jnp.sum(e, axis=-1, keepdims=True))        # softmax over j
        term = ca_h * gate[h] * sc("comb", h)
        wcomb = term if wcomb is None else wcomb + term
    u = wcomb * sc("cns", 0) * recip(jnp.maximum(dist, 1e-8))       # CoorsNorm scaling
    cout = jnp.concatenate(
        [jnp.sum(u * rel[c], axis=-1, keepdims=True) for c in range(3)], axis=-1)

    # --- feature attention branch ----------------------------------------------
    out = None
    for h in range(heads):
        m = jnp.max(qk[h], axis=-1, keepdims=True)
        e = jnp.exp(qk[h] - m)
        attn_h = e * recip(jnp.sum(e, axis=-1, keepdims=True))      # [ti, n]
        o_h = jnp.dot(attn_h.astype(mxu_dtype), vh[h].astype(mxu_dtype),
                      preferred_element_type=f32)                   # attn @ v  [ti, dh]
        # value_pos factored: contract attn against the MLP hidden over j first,
        # then expand to dim_head with the (pd, dh) per-head weight (pd << hd).
        a_h = jnp.concatenate(
            [jnp.sum(attn_h * hp[p_], axis=-1, keepdims=True) for p_ in range(pd)],
            axis=-1)                                                # [ti, pd]
        o_h = o_h + jnp.dot(a_h.astype(mxu_dtype), wvph[h].astype(mxu_dtype),
                            preferred_element_type=f32)
        o_h = o_h + svec[:, h * dh:(h + 1) * dh]                    # bvp_h (sum_j attn == 1)
        contrib = jnp.dot(o_h.astype(mxu_dtype), woh[h].astype(mxu_dtype),
                          preferred_element_type=f32)               # to_out, per head slice
        out = contrib if out is None else out + contrib
    out = out + svec[:, hd:hd + out_dim]                            # to_out bias

    out_ref[0] = out.astype(out_ref.dtype)
    cout_ref[0] = cout.astype(cout_ref.dtype)


# ----------------------------------------------------------------------------
# wrapper
# ----------------------------------------------------------------------------
_SMALL_PARAM_ORDER = ("wp0", "bp0", "lg0", "lb0", "bp1", "lg1", "lb1",
                      "bp2", "lg2", "lb2", "bqk", "bg", "comb", "cns")


def _pack_small_params(params):
    offs, cur, arrs = {}, 0, []
    for name in _SMALL_PARAM_ORDER:
        a = params[name].astype(jnp.float32)
        offs[name] = cur
        cur += a.shape[1]
        arrs.append(a)
    return jnp.concatenate(arrs, axis=1), offs


def equivariant_attention_pallas(feats, coors, params, *, heads, dim_head,
                                 scale=8, tile_m=512, tile_i=128,
                                 mxu_dtype=jnp.bfloat16, approx_recip=True):
    """Forward of EquivariantAttention (default path). Returns (out, coors_out)."""
    B, N, D = feats.shape
    dh = dim_head
    hd = heads * dh
    assert coors.shape == (B, N, 3)
    pd = params["wp1"].shape[0]

    # ---- stage 1: row-parallel LayerNorm + q/k/v projection + per-head l2norm ----
    M = B * N
    tm = max(8, min(_round_up(tile_m, 8), _round_up(M, 8)))   # tall tiles, clipped to M
    M_pad = _round_up(M, tm)
    x = feats.reshape(M, D).astype(jnp.float32)
    if M_pad != M:
        x = jnp.pad(x, ((0, M_pad - M), (0, 0)))              # zero rows are benign

    qn, kn, v = pl.pallas_call(
        functools.partial(_qkv_kernel, heads=heads, dim_head=dh, mxu_dtype=mxu_dtype),
        out_shape=[jax.ShapeDtypeStruct((M_pad, hd), mxu_dtype)] * 3,
        grid_spec=pl.GridSpec(
            grid=(M_pad // tm,),
            in_specs=[
                pl.BlockSpec((tm, D), lambda i: (i, 0)),      # token rows
                pl.BlockSpec((1, D), lambda i: (0, 0)),       # LayerNorm gamma
                pl.BlockSpec((D, hd), lambda i: (0, 0)),      # Wq (constant block)
                pl.BlockSpec((D, hd), lambda i: (0, 0)),      # Wk
                pl.BlockSpec((D, hd), lambda i: (0, 0)),      # Wv
            ],
            out_specs=[pl.BlockSpec((tm, hd), lambda i: (i, 0))] * 3,
        ),
        compiler_params=pltpu.CompilerParams(
            dimension_semantics=("parallel",),
            vmem_limit_bytes=48 * 1024 * 1024),
    )(x, params["ln_g"].astype(jnp.float32),
      params["wq"].astype(mxu_dtype), params["wk"].astype(mxu_dtype),
      params["wv"].astype(mxu_dtype))

    def to_heads(t):                                          # (M,hd) -> (B,H,N,dh)
        return jnp.transpose(t[:M].reshape(B, N, heads, dh), (0, 2, 1, 3))

    qhh, khh, vhh = to_heads(qn), to_heads(kn), to_heads(v)

    # ---- stage 2: fused pos-bias MLP + attention + coordinate update -------------
    ti = max(8, _round_up(min(tile_i, _round_up(N, 8)), 8))
    Ni = _round_up(N, ti)                                     # pad queries, keep keys = N
    ci = coors.astype(jnp.float32)
    if Ni != N:
        qhh = jnp.pad(qhh, ((0, 0), (0, 0), (0, Ni - N), (0, 0)))
        ci = jnp.pad(ci, ((0, 0), (0, Ni - N), (0, 0)))       # padded rows sliced off below
    cjt = jnp.transpose(coors.astype(jnp.float32), (0, 2, 1))  # (B, 3, N)

    srow, offs = _pack_small_params(params)                   # one DMA for 14 tiny params
    svec = jnp.concatenate([params["bvp"], params["bo"]], axis=1).astype(jnp.float32)
    wvp_h = jnp.transpose(params["wvp"].reshape(pd, heads, dh), (1, 0, 2)).astype(jnp.float32)
    wo_h = params["wo"].reshape(heads, dh, D).astype(jnp.float32)
    w2d = [params[k].astype(jnp.float32) for k in ("wp1", "wp2", "wqk", "wc1", "wc2", "wg")]

    def const2(a):
        return pl.BlockSpec(a.shape, lambda b, it: (0, 0))

    in_specs = [
        pl.BlockSpec((1, heads, ti, dh), lambda b, it: (b, 0, it, 0)),   # q (query tile)
        pl.BlockSpec((1, heads, N, dh), lambda b, it: (b, 0, 0, 0)),     # k (all rows)
        pl.BlockSpec((1, heads, N, dh), lambda b, it: (b, 0, 0, 0)),     # v (all rows)
        pl.BlockSpec((1, ti, 3), lambda b, it: (b, it, 0)),              # coords (queries)
        pl.BlockSpec((1, 3, N), lambda b, it: (b, 0, 0)),                # coords^T (keys)
        const2(srow), const2(svec),
    ] + [const2(a) for a in w2d] + [
        pl.BlockSpec(wvp_h.shape, lambda b, it: (0, 0, 0)),
        pl.BlockSpec(wo_h.shape, lambda b, it: (0, 0, 0)),
    ]

    out_full, cout_full = pl.pallas_call(
        functools.partial(_attn_coors_kernel, heads=heads, dim_head=dh,
                          scale=float(scale), offs=offs,
                          mxu_dtype=mxu_dtype, approx_recip=approx_recip),
        out_shape=[jax.ShapeDtypeStruct((B, Ni, D), feats.dtype),
                   jax.ShapeDtypeStruct((B, Ni, 3), jnp.float32)],
        grid_spec=pl.GridSpec(
            grid=(B, Ni // ti),
            in_specs=in_specs,
            out_specs=[pl.BlockSpec((1, ti, D), lambda b, it: (b, it, 0)),
                       pl.BlockSpec((1, ti, 3), lambda b, it: (b, it, 0))],
        ),
        compiler_params=pltpu.CompilerParams(
            dimension_semantics=("parallel", "parallel"),
            vmem_limit_bytes=48 * 1024 * 1024),
    )(qhh, khh, vhh, ci, cjt, srow, svec, *w2d, wvp_h, wo_h)

    return out_full[:, :N], cout_full[:, :N]


# ----------------------------------------------------------------------------
# parameters + pure-JAX reference (mirror of the PyTorch forward, default path)
# ----------------------------------------------------------------------------
def init_params(key, *, dim, heads, dim_head, coors_hidden_dim=16, dtype=jnp.float32):
    hd = heads * dim_head
    pd = dim // 2                          # DynamicPositionBias hidden width
    ks = list(jax.random.split(key, 24))

    def nrm(shape, s=0.1):
        return jax.random.normal(ks.pop(), shape, dtype) * s

    ones = lambda shape: jnp.ones(shape, dtype)
    zeros = lambda shape: jnp.zeros(shape, dtype)

    return {
        "ln_g": ones((1, dim)),                                   # LayerNorm(dim), beta == 0
        "wq": nrm((dim, hd)), "wk": nrm((dim, hd)), "wv": nrm((dim, hd)),
        # DynamicPositionBias: (Linear -> LayerNorm -> SiLU) x 3 + qk / value heads
        "wp0": nrm((1, pd)), "bp0": nrm((1, pd), 0.02),
        "lg0": ones((1, pd)), "lb0": zeros((1, pd)),
        "wp1": nrm((pd, pd)), "bp1": nrm((1, pd), 0.02),
        "lg1": ones((1, pd)), "lb1": zeros((1, pd)),
        "wp2": nrm((pd, pd)), "bp2": nrm((1, pd), 0.02),
        "lg2": ones((1, pd)), "lb2": zeros((1, pd)),
        "wqk": nrm((pd, heads)), "bqk": nrm((1, heads), 0.02),
        "wvp": nrm((pd, hd)), "bvp": nrm((1, hd), 0.02),
        # coors_mlp (no bias) and coors_gate (with bias)
        "wc1": nrm((heads, coors_hidden_dim)), "wc2": nrm((coors_hidden_dim, heads)),
        "wg": nrm((heads, heads)), "bg": nrm((1, heads), 0.02),
        "cns": ones((1, 1)),                                      # CoorsNorm scale_init=1.0
        "comb": nrm((1, heads), 1.0),                             # coors_combine
        "wo": nrm((hd, dim)), "bo": nrm((1, dim), 0.02),          # to_out
    }


def equivariant_attention_ref(feats, coors, params, *, heads, dim_head, scale=8):
    B, N, _ = feats.shape
    hd = heads * dim_head
    p = params
    hp = jax.lax.Precision.HIGHEST
    f32 = jnp.float32

    x = _layernorm(feats.astype(f32), p["ln_g"][0], 0.0)

    def heads_split(t):                                            # b n (h d) -> b h n d
        return t.reshape(B, N, heads, dim_head).transpose(0, 2, 1, 3)

    q = heads_split(jnp.matmul(x, p["wq"], precision=hp))
    k = heads_split(jnp.matmul(x, p["wk"], precision=hp))
    v = heads_split(jnp.matmul(x, p["wv"], precision=hp))

    def l2norm(t):
        nrm = jnp.sqrt(jnp.sum(t * t, axis=-1, keepdims=True))
        return t / jnp.maximum(nrm, 1e-12)

    q, k = l2norm(q), l2norm(k)

    c = coors.astype(f32)
    rel = c[:, :, None, :] - c[:, None, :, :]                      # b i j 3
    dist = jnp.sqrt(jnp.sum(rel * rel, axis=-1))                   # b i j

    pos = (-100.0 * dist)[..., None]                               # b i j 1
    h = _silu(_layernorm(pos * p["wp0"][0] + p["bp0"][0], p["lg0"][0], p["lb0"][0]))
    h = _silu(_layernorm(jnp.einsum("...i,ij->...j", h, p["wp1"], precision=hp) + p["bp1"][0],
                         p["lg1"][0], p["lb1"][0]))
    h = _silu(_layernorm(jnp.einsum("...i,ij->...j", h, p["wp2"], precision=hp) + p["bp2"][0],
                         p["lg2"][0], p["lb2"][0]))
    qk_pos = jnp.einsum("...i,ih->...h", h, p["wqk"], precision=hp) + p["bqk"][0]   # b i j H
    value_pos = jnp.einsum("...i,if->...f", h, p["wvp"], precision=hp) + p["bvp"][0]  # b i j hd
    qk_pos = qk_pos.transpose(0, 3, 1, 2)                                           # b h i j
    value_pos = value_pos.reshape(B, N, N, heads, dim_head).transpose(0, 3, 1, 2, 4)  # b h i j d

    sim = jnp.einsum("bhid,bhjd->bhij", q, k, precision=hp) * scale
    qk = sim + qk_pos
    v_pair = v[:, :, None, :, :] + value_pos                                        # b h i j d

    cmi = qk.transpose(0, 2, 3, 1)                                                  # b i j h
    cw = jnp.einsum("...h,hm->...m", cmi, p["wc1"], precision=hp)
    cw = jnp.einsum("...m,mh->...h", _gelu(cw), p["wc2"], precision=hp)
    coor_attn = _softmax(cw, axis=2)                                                # over j
    gate = jnp.tanh(jnp.einsum("...h,hg->...g", cmi, p["wg"], precision=hp) + p["bg"][0])

    rel_norm = jnp.sqrt(jnp.sum(rel * rel, axis=-1, keepdims=True))
    rel_unit = rel / jnp.maximum(rel_norm, 1e-8) * p["cns"][0, 0]                   # CoorsNorm
    rel_out = jnp.einsum("bijh,bijc->bich", coor_attn * gate, rel_unit, precision=hp)
    coors_out = jnp.einsum("bich,h->bic", rel_out, p["comb"][0], precision=hp)

    attn = _softmax(qk, axis=-1)
    out = jnp.einsum("bhij,bhijd->bhid", attn, v_pair, precision=hp)
    out = out.transpose(0, 2, 1, 3).reshape(B, N, hd)                               # b n (h d)
    out = jnp.matmul(out, p["wo"], precision=hp) + p["bo"][0]
    return out.astype(feats.dtype), coors_out


if __name__ == "__main__":
    key = jax.random.PRNGKey(0)
    kf, kc, kp = jax.random.split(key, 3)

    B, N, dim = 2, 16, 32
    heads, dim_head, scale = 4, 16, 8

    feats = jax.random.normal(kf, (B, N, dim), jnp.float32)
    coors = jax.random.normal(kc, (B, N, 3), jnp.float32)
    params = init_params(kp, dim=dim, heads=heads, dim_head=dim_head)

    ref_out, ref_coors = equivariant_attention_ref(
        feats, coors, params, heads=heads, dim_head=dim_head, scale=scale)

    # exact path: f32 MXU operands, exact reciprocals -> tight check
    out, coors_out = equivariant_attention_pallas(
        feats, coors, params, heads=heads, dim_head=dim_head, scale=scale,
        mxu_dtype=jnp.float32, approx_recip=False)
    out, coors_out = jax.block_until_ready((out, coors_out))
    assert out.shape == (B, N, dim) and coors_out.shape == (B, N, 3)
    assert jnp.allclose(out, ref_out, atol=2e-4, rtol=2e-4), \
        "feature output mismatch vs JAX reference (f32 path)"
    assert jnp.allclose(coors_out, ref_coors, atol=2e-4, rtol=2e-4), \
        "coordinate output mismatch vs JAX reference (f32 path)"

    # fast path (default): bf16 MXU operands + approx EUP reciprocal -> loose check
    out_bf, coors_bf = equivariant_attention_pallas(
        feats, coors, params, heads=heads, dim_head=dim_head, scale=scale)
    out_bf, coors_bf = jax.block_until_ready((out_bf, coors_bf))
    assert jnp.allclose(out_bf, ref_out, atol=1e-1, rtol=1e-1), \
        "feature output mismatch vs JAX reference (bf16 fast path)"
    assert jnp.allclose(coors_bf, ref_coors, atol=1e-1, rtol=1e-1), \
        "coordinate output mismatch vs JAX reference (bf16 fast path)"

    print("KERNEL_OK")
</pallas_src>

<mosaic_0001>
module attributes {stable_mosaic.version = 11 : i64} {
  func.func @_qkv_kernel(%arg0: i32, %arg1: memref<32x32xf32, #tpu.memory_space<vmem>>, %arg2: memref<1x32xf32, #tpu.memory_space<vmem>>, %arg3: memref<32x64xf32, #tpu.memory_space<vmem>>, %arg4: memref<32x64xf32, #tpu.memory_space<vmem>>, %arg5: memref<32x64xf32, #tpu.memory_space<vmem>>, %arg6: memref<32x64xf32, #tpu.memory_space<vmem>>, %arg7: memref<32x64xf32, #tpu.memory_space<vmem>>, %arg8: memref<32x64xf32, #tpu.memory_space<vmem>>) attributes {dimension_semantics = [#tpu.dimension_semantics<parallel>], iteration_bounds = array<i64: 1>, scalar_prefetch = 0 : i64, scratch_operands = 0 : i64, tpu.core_type = #tpu.core_type<tc>, window_params = [{transform_indices = @transform_0, window_bounds = array<i64: 32, 32>}, {pipeline_mode = #tpu.pipeline_mode<synchronous>, transform_indices = @transform_1, window_bounds = array<i64: 1, 32>}, {pipeline_mode = #tpu.pipeline_mode<synchronous>, transform_indices = @transform_2, window_bounds = array<i64: 32, 64>}, {pipeline_mode = #tpu.pipeline_mode<synchronous>, transform_indices = @transform_3, window_bounds = array<i64: 32, 64>}, {pipeline_mode = #tpu.pipeline_mode<synchronous>, transform_indices = @transform_4, window_bounds = array<i64: 32, 64>}, {transform_indices = @transform_5, window_bounds = array<i64: 32, 64>}, {transform_indices = @transform_6, window_bounds = array<i64: 32, 64>}, {transform_indices = @transform_7, window_bounds = array<i64: 32, 64>}]} {
    %c0 = arith.constant 0 : index
    %c0_0 = arith.constant 0 : index
    %0 = vector.load %arg1[%c0, %c0_0] : memref<32x32xf32, #tpu.memory_space<vmem>>, vector<32x32xf32>
    %c0_1 = arith.constant 0 : index
    %c0_2 = arith.constant 0 : index
    %1 = vector.load %arg2[%c0_1, %c0_2] : memref<1x32xf32, #tpu.memory_space<vmem>>, vector<1x32xf32>
    %cst = arith.constant dense<0.000000e+00> : vector<32xf32>
    %2 = vector.multi_reduction <add>, %0, %cst [1] : vector<32x32xf32> to vector<32xf32>
    %3 = vector.shape_cast %2 : vector<32xf32> to vector<32x1xf32>
    %cst_3 = arith.constant 3.200000e+01 : f32
    %4 = vector.broadcast %cst_3 : f32 to vector<32x1xf32>
    %5 = arith.divf %3, %4 : vector<32x1xf32>
    %6 = vector.broadcast %5 : vector<32x1xf32> to vector<32x32xf32>
    %7 = arith.subf %0, %6 : vector<32x32xf32>
    %8 = vector.broadcast %5 : vector<32x1xf32> to vector<32x32xf32>
    %9 = arith.subf %0, %8 : vector<32x32xf32>
    %10 = arith.mulf %7, %9 : vector<32x32xf32>
    %cst_4 = arith.constant dense<0.000000e+00> : vector<32xf32>
    %11 = vector.multi_reduction <add>, %10, %cst_4 [1] : vector<32x32xf32> to vector<32xf32>
    %12 = vector.shape_cast %11 : vector<32xf32> to vector<32x1xf32>
    %cst_5 = arith.constant 3.200000e+01 : f32
    %13 = vector.broadcast %cst_5 : f32 to vector<32x1xf32>
    %14 = arith.divf %12, %13 : vector<32x1xf32>
    %15 = vector.broadcast %5 : vector<32x1xf32> to vector<32x32xf32>
    %16 = arith.subf %0, %15 : vector<32x32xf32>
    %cst_6 = arith.constant 9.99999974E-6 : f32
    %17 = vector.broadcast %cst_6 : f32 to vector<32x1xf32>
    %18 = arith.addf %14, %17 : vector<32x1xf32>
    %19 = math.rsqrt %18 : vector<32x1xf32>
    %20 = vector.broadcast %19 : vector<32x1xf32> to vector<32x32xf32>
    %21 = arith.mulf %16, %20 : vector<32x32xf32>
    %22 = vector.broadcast %1 : vector<1x32xf32> to vector<32x32xf32>
    %23 = arith.mulf %21, %22 : vector<32x32xf32>
    %cst_7 = arith.constant 0.000000e+00 : f32
    %24 = vector.broadcast %cst_7 : f32 to vector<32x32xf32>
    %25 = arith.addf %23, %24 : vector<32x32xf32>
    %c0_8 = arith.constant 0 : index
    %c0_9 = arith.constant 0 : index
    %26 = vector.load %arg3[%c0_8, %c0_9] : memref<32x64xf32, #tpu.memory_space<vmem>>, vector<32x64xf32>
    %cst_10 = arith.constant dense<0.000000e+00> : vector<32x64xf32>
    %27 = tpu.matmul %25, %26, %cst_10 {dimension_numbers = #tpu.dot_dimension_numbers<[1], [0], [0], [1], [0, 0, 1, 1], [], []>} : vector<32x32xf32>, vector<32x64xf32>, vector<32x64xf32> -> vector<32x64xf32>
    %c0_11 = arith.constant 0 : index
    %c0_12 = arith.constant 0 : index
    %28 = vector.load %arg4[%c0_11, %c0_12] : memref<32x64xf32, #tpu.memory_space<vmem>>, vector<32x64xf32>
    %cst_13 = arith.constant dense<0.000000e+00> : vector<32x64xf32>
    %29 = tpu.matmul %25, %28, %cst_13 {dimension_numbers = #tpu.dot_dimension_numbers<[1], [0], [0], [1], [0, 0, 1, 1], [], []>} : vector<32x32xf32>, vector<32x64xf32>, vector<32x64xf32> -> vector<32x64xf32>
    %c0_14 = arith.constant 0 : index
    %c0_15 = arith.constant 0 : index
    %30 = vector.load %arg5[%c0_14, %c0_15] : memref<32x64xf32, #tpu.memory_space<vmem>>, vector<32x64xf32>
    %cst_16 = arith.constant dense<0.000000e+00> : vector<32x64xf32>
    %31 = tpu.matmul %25, %30, %cst_16 {dimension_numbers = #tpu.dot_dimension_numbers<[1], [0], [0], [1], [0, 0, 1, 1], [], []>} : vector<32x32xf32>, vector<32x64xf32>, vector<32x64xf32> -> vector<32x64xf32>
    %32 = vector.extract_strided_slice %27 {offsets = [0, 0], sizes = [32, 16], strides = [1, 1]} : vector<32x64xf32> to vector<32x16xf32>
    %33 = arith.mulf %32, %32 : vector<32x16xf32>
    %cst_17 = arith.constant dense<0.000000e+00> : vector<32xf32>
    %34 = vector.multi_reduction <add>, %33, %cst_17 [1] : vector<32x16xf32> to vector<32xf32>
    %35 = vector.shape_cast %34 : vector<32xf32> to vector<32x1xf32>
    %36 = math.sqrt %35 : vector<32x1xf32>
    %cst_18 = arith.constant 9.99999996E-13 : f32
    %37 = vector.broadcast %cst_18 : f32 to vector<32x1xf32>
    %38 = arith.maximumf %36, %37 : vector<32x1xf32>
    %cst_19 = arith.constant 1.000000e+00 : f32
    %39 = vector.broadcast %cst_19 : f32 to vector<32x1xf32>
    %40 = arith.divf %39, %38 : vector<32x1xf32>
    %41 = vector.broadcast %40 : vector<32x1xf32> to vector<32x16xf32>
    %42 = arith.mulf %32, %41 : vector<32x16xf32>
    %43 = vector.extract_strided_slice %27 {offsets = [0, 16], sizes = [32, 16], strides = [1, 1]} : vector<32x64xf32> to vector<32x16xf32>
    %44 = arith.mulf %43, %43 : vector<32x16xf32>
    %cst_20 = arith.constant dense<0.000000e+00> : vector<32xf32>
    %45 = vector.multi_reduction <add>, %44, %cst_20 [1] : vector<32x16xf32> to vector<32xf32>
    %46 = vector.shape_cast %45 : vector<32xf32> to vector<32x1xf32>
    %47 = math.sqrt %46 : vector<32x1xf32>
    %cst_21 = arith.constant 9.99999996E-13 : f32
    %48 = vector.broadcast %cst_21 : f32 to vector<32x1xf32>
    %49 = arith.maximumf %47, %48 : vector<32x1xf32>
    %cst_22 = arith.constant 1.000000e+00 : f32
    %50 = vector.broadcast %cst_22 : f32 to vector<32x1xf32>
    %51 = arith.divf %50, %49 : vector<32x1xf32>
    %52 = vector.broadcast %51 : vector<32x1xf32> to vector<32x16xf32>
    %53 = arith.mulf %43, %52 : vector<32x16xf32>
    %54 = vector.extract_strided_slice %27 {offsets = [0, 32], sizes = [32, 16], strides = [1, 1]} : vector<32x64xf32> to vector<32x16xf32>
    %55 = arith.mulf %54, %54 : vector<32x16xf32>
    %cst_23 = arith.constant dense<0.000000e+00> : vector<32xf32>
    %56 = vector.multi_reduction <add>, %55, %cst_23 [1] : vector<32x16xf32> to vector<32xf32>
    %57 = vector.shape_cast %56 : vector<32xf32> to vector<32x1xf32>
    %58 = math.sqrt %57 : vector<32x1xf32>
    %cst_24 = arith.constant 9.99999996E-13 : f32
    %59 = vector.broadcast %cst_24 : f32 to vector<32x1xf32>
    %60 = arith.maximumf %58, %59 : vector<32x1xf32>
    %cst_25 = arith.constant 1.000000e+00 : f32
    %61 = vector.broadcast %cst_25 : f32 to vector<32x1xf32>
    %62 = arith.divf %61, %60 : vector<32x1xf32>
    %63 = vector.broadcast %62 : vector<32x1xf32> to vector<32x16xf32>
    %64 = arith.mulf %54, %63 : vector<32x16xf32>
    %65 = vector.extract_strided_slice %27 {offsets = [0, 48], sizes = [32, 16], strides = [1, 1]} : vector<32x64xf32> to vector<32x16xf32>
    %66 = arith.mulf %65, %65 : vector<32x16xf32>
    %cst_26 = arith.constant dense<0.000000e+00> : vector<32xf32>
    %67 = vector.multi_reduction <add>, %66, %cst_26 [1] : vector<32x16xf32> to vector<32xf32>
    %68 = vector.shape_cast %67 : vector<32xf32> to vector<32x1xf32>
    %69 = math.sqrt %68 : vector<32x1xf32>
    %cst_27 = arith.constant 9.99999996E-13 : f32
    %70 = vector.broadcast %cst_27 : f32 to vector<32x1xf32>
    %71 = arith.maximumf %69, %70 : vector<32x1xf32>
    %cst_28 = arith.constant 1.000000e+00 : f32
    %72 = vector.broadcast %cst_28 : f32 to vector<32x1xf32>
    %73 = arith.divf %72, %71 : vector<32x1xf32>
    %74 = vector.broadcast %73 : vector<32x1xf32> to vector<32x16xf32>
    %75 = arith.mulf %65, %74 : vector<32x16xf32>
    %76 = tpu.concatenate %42, %53, %64, %75 in 1 : vector<32x16xf32>, vector<32x16xf32>, vector<32x16xf32>, vector<32x16xf32> -> vector<32x64xf32>
    %c0_29 = arith.constant 0 : index
    %c0_30 = arith.constant 0 : index
    %77 = vector.load %arg6[%c0_29, %c0_30] : memref<32x64xf32, #tpu.memory_space<vmem>>, vector<32x64xf32>
    tpu.vector_store %arg6[%c0_29, %c0_30], %76 {strides = array<i32>} : memref<32x64xf32, #tpu.memory_space<vmem>>, vector<32x64xf32>,
    %78 = vector.extract_strided_slice %29 {offsets = [0, 0], sizes = [32, 16], strides = [1, 1]} : vector<32x64xf32> to vector<32x16xf32>
    %79 = arith.mulf %78, %78 : vector<32x16xf32>
    %cst_31 = arith.constant dense<0.000000e+00> : vector<32xf32>
    %80 = vector.multi_reduction <add>, %79, %cst_31 [1] : vector<32x16xf32> to vector<32xf32>
    %81 = vector.shape_cast %80 : vector<32xf32> to vector<32x1xf32>
    %82 = math.sqrt %81 : vector<32x1xf32>
    %cst_32 = arith.constant 9.99999996E-13 : f32
    %83 = vector.broadcast %cst_32 : f32 to vector<32x1xf32>
    %84 = arith.maximumf %82, %83 : vector<32x1xf32>
    %cst_33 = arith.constant 1.000000e+00 : f32
    %85 = vector.broadcast %cst_33 : f32 to vector<32x1xf32>
    %86 = arith.divf %85, %84 : vector<32x1xf32>
    %87 = vector.broadcast %86 : vector<32x1xf32> to vector<32x16xf32>
    %88 = arith.mulf %78, %87 : vector<32x16xf32>
    %89 = vector.extract_strided_slice %29 {offsets = [0, 16], sizes = [32, 16], strides = [1, 1]} : vector<32x64xf32> to vector<32x16xf32>
    %90 = arith.mulf %89, %89 : vector<32x16xf32>
    %cst_34 = arith.constant dense<0.000000e+00> : vector<32xf32>
    %91 = vector.multi_reduction <add>, %90, %cst_34 [1] : vector<32x16xf32> to vector<32xf32>
    %92 = vector.shape_cast %91 : vector<32xf32> to vector<32x1xf32>
    %93 = math.sqrt %92 : vector<32x1xf32>
    %cst_35 = arith.constant 9.99999996E-13 : f32
    %94 = vector.broadcast %cst_35 : f32 to vector<32x1xf32>
    %95 = arith.maximumf %93, %94 : vector<32x1xf32>
    %cst_36 = arith.constant 1.000000e+00 : f32
    %96 = vector.broadcast %cst_36 : f32 to vector<32x1xf32>
    %97 = arith.divf %96, %95 : vector<32x1xf32>
    %98 = vector.broadcast %97 : vector<32x1xf32> to vector<32x16xf32>
    %99 = arith.mulf %89, %98 : vector<32x16xf32>
    %100 = vector.extract_strided_slice %29 {offsets = [0, 32], sizes = [32, 16], strides = [1, 1]} : vector<32x64xf32> to vector<32x16xf32>
    %101 = arith.mulf %100, %100 : vector<32x16xf32>
    %cst_37 = arith.constant dense<0.000000e+00> : vector<32xf32>
    %102 = vector.multi_reduction <add>, %101, %cst_37 [1] : vector<32x16xf32> to vector<32xf32>
    %103 = vector.shape_cast %102 : vector<32xf32> to vector<32x1xf32>
    %104 = math.sqrt %103 : vector<32x1xf32>
    %cst_38 = arith.constant 9.99999996E-13 : f32
    %105 = vector.broadcast %cst_38 : f32 to vector<32x1xf32>
    %106 = arith.maximumf %104, %105 : vector<32x1xf32>
    %cst_39 = arith.constant 1.000000e+00 : f32
    %107 = vector.broadcast %cst_39 : f32 to vector<32x1xf32>
    %108 = arith.divf %107, %106 : vector<32x1xf32>
    %109 = vector.broadcast %108 : vector<32x1xf32> to vector<32x16xf32>
    %110 = arith.mulf %100, %109 : vector<32x16xf32>
    %111 = vector.extract_strided_slice %29 {offsets = [0, 48], sizes = [32, 16], strides = [1, 1]} : vector<32x64xf32> to vector<32x16xf32>
    %112 = arith.mulf %111, %111 : vector<32x16xf32>
    %cst_40 = arith.constant dense<0.000000e+00> : vector<32xf32>
    %113 = vector.multi_reduction <add>, %112, %cst_40 [1] : vector<32x16xf32> to vector<32xf32>
    %114 = vector.shape_cast %113 : vector<32xf32> to vector<32x1xf32>
    %115 = math.sqrt %114 : vector<32x1xf32>
    %cst_41 = arith.constant 9.99999996E-13 : f32
    %116 = vector.broadcast %cst_41 : f32 to vector<32x1xf32>
    %117 = arith.maximumf %115, %116 : vector<32x1xf32>
    %cst_42 = arith.constant 1.000000e+00 : f32
    %118 = vector.broadcast %cst_42 : f32 to vector<32x1xf32>
    %119 = arith.divf %118, %117 : vector<32x1xf32>
    %120 = vector.broadcast %119 : vector<32x1xf32> to vector<32x16xf32>
    %121 = arith.mulf %111, %120 : vector<32x16xf32>
    %122 = tpu.concatenate %88, %99, %110, %121 in 1 : vector<32x16xf32>, vector<32x16xf32>, vector<32x16xf32>, vector<32x16xf32> -> vector<32x64xf32>
    %c0_43 = arith.constant 0 : index
    %c0_44 = arith.constant 0 : index
    %123 = vector.load %arg7[%c0_43, %c0_44] : memref<32x64xf32, #tpu.memory_space<vmem>>, vector<32x64xf32>
    tpu.vector_store %arg7[%c0_43, %c0_44], %122 {strides = array<i32>} : memref<32x64xf32, #tpu.memory_space<vmem>>, vector<32x64xf32>,
    %c0_45 = arith.constant 0 : index
    %c0_46 = arith.constant 0 : index
    %124 = vector.load %arg8[%c0_45, %c0_46] : memref<32x64xf32, #tpu.memory_space<vmem>>, vector<32x64xf32>
    tpu.vector_store %arg8[%c0_45, %c0_46], %31 {strides = array<i32>} : memref<32x64xf32, #tpu.memory_space<vmem>>, vector<32x64xf32>,
    return
  }
  func.func @transform_0(%arg0: i32) -> (i32, i32) {
    %c0_i32 = arith.constant 0 : i32
    %c0_i32_0 = arith.constant 0 : i32
    return %arg0, %c0_i32 : i32, i32
  }
  func.func @transform_1(%arg0: i32) -> (i32, i32) {
    %c0_i32 = arith.constant 0 : i32
    %c0_i32_0 = arith.constant 0 : i32
    %c0_i32_1 = arith.constant 0 : i32
    return %c0_i32, %c0_i32_0 : i32, i32
  }
  func.func @transform_2(%arg0: i32) -> (i32, i32) {
    %c0_i32 = arith.constant 0 : i32
    %c0_i32_0 = arith.constant 0 : i32
    %c0_i32_1 = arith.constant 0 : i32
    return %c0_i32, %c0_i32_0 : i32, i32
  }
  func.func @transform_3(%arg0: i32) -> (i32, i32) {
    %c0_i32 = arith.constant 0 : i32
    %c0_i32_0 = arith.constant 0 : i32
    %c0_i32_1 = arith.constant 0 : i32
    return %c0_i32, %c0_i32_0 : i32, i32
  }
  func.func @transform_4(%arg0: i32) -> (i32, i32) {
    %c0_i32 = arith.constant 0 : i32
    %c0_i32_0 = arith.constant 0 : i32
    %c0_i32_1 = arith.constant 0 : i32
    return %c0_i32, %c0_i32_0 : i32, i32
  }
  func.func @transform_5(%arg0: i32) -> (i32, i32) {
    %c0_i32 = arith.constant 0 : i32
    %c0_i32_0 = arith.constant 0 : i32
    return %arg0, %c0_i32 : i32, i32
  }
  func.func @transform_6(%arg0: i32) -> (i32, i32) {
    %c0_i32 = arith.constant 0 : i32
    %c0_i32_0 = arith.constant 0 : i32
    return %arg0, %c0_i32 : i32, i32
  }
  func.func @transform_7(%arg0: i32) -> (i32, i32) {
    %c0_i32 = arith.constant 0 : i32
    %c0_i32_0 = arith.constant 0 : i32
    return %arg0, %c0_i32 : i32, i32
  }
}

</mosaic_0001>

<llo_original>
// kernel: tpu_custom_call.1
$region0: #{tpu_custom_call.1}
  #allocation0 [shape = 'u32[]', space=smem, size = 0x4, offset = 0x4, fixed_abs, tag = 'smem constant byte address 0x4 - core index']
  #allocation1 [shape = 'u32[72,128]{1,0:T(1,128)}', space=vmem, size = 0x9000, scoped, tag = 'internal scratch']
  %s0 = inlined_call_operand.hbm [shape: f32[32,32], index: 0, kind: input, shape index: {}]
  %s1 = inlined_call_operand.hbm [shape: f32[1,32], index: 1, kind: input, shape index: {}]
  %s2 = inlined_call_operand.hbm [shape: f32[32,64], index: 2, kind: input, shape index: {}]
  %s3 = inlined_call_operand.hbm [shape: f32[32,64], index: 3, kind: input, shape index: {}]
  %s4 = inlined_call_operand.hbm [shape: f32[32,64], index: 4, kind: input, shape index: {}]
  %s5 = inlined_call_operand.hbm [shape: f32[32,64], index: 5, kind: output, shape index: {0}]
  %s6 = inlined_call_operand.hbm [shape: f32[32,64], index: 6, kind: output, shape index: {1}]
  %s7 = inlined_call_operand.hbm [shape: f32[32,64], index: 7, kind: output, shape index: {2}]
  %8 = xla_tuple %s5, %s6, %s7
  %s9 = sld [smem:[#allocation0]]
  $region66: #{tpu_custom_call.1} parent=0
    _
  %s11 = ssub.s32 1, %s9
  %s12 = scalar_select 0, %s11, %s9
  $region1: #{tpu_custom_call.1} parent=0
    #allocation2 [shape = 'u8[16384]{0}', space=vmem, size = 0x4000, scoped, tag = 'input window, operand 0, single buffered']
    #allocation3 [shape = 's32[1]{0}', space=sflag, size = 0x4, scoped, tag = 'scoped memory for tpu_custom_call.1']
    #allocation4 [shape = 's32[1]{0}', space=sflag, size = 0x4, scoped, tag = 'scoped memory for tpu_custom_call.1']
    #allocation5 [shape = 'u8[512]{0}', space=vmem, size = 0x400, scoped, tag = 'input window, operand 1, single buffered']
    #allocation6 [shape = 's32[1]{0}', space=sflag, size = 0x4, scoped, tag = 'scoped memory for tpu_custom_call.1']
    #allocation7 [shape = 'u8[16384]{0}', space=vmem, size = 0x4000, scoped, tag = 'input window, operand 2, single buffered']
    #allocation8 [shape = 'u8[16384]{0}', space=vmem, size = 0x4000, scoped, tag = 'input window, operand 3, single buffered']
    #allocation9 [shape = 's32[1]{0}', space=sflag, size = 0x4, scoped, tag = 'scoped memory for tpu_custom_call.1']
    #allocation10 [shape = 'u8[16384]{0}', space=vmem, size = 0x4000, scoped, tag = 'input window, operand 4, single buffered']
    #allocation11 [shape = 'u8[16384]{0}', space=vmem, size = 0x4000, scoped, tag = 'output window, operand 0, single buffered']
    #allocation12 [shape = 'u8[16384]{0}', space=vmem, size = 0x4000, scoped, tag = 'output window, operand 1, single buffered']
    #allocation13 [shape = 's32[1]{0}', space=sflag, size = 0x4, scoped, tag = 'scoped memory for tpu_custom_call.1']
    #allocation14 [shape = 'u8[16384]{0}', space=vmem, size = 0x4000, scoped, tag = 'output window, operand 2, single buffered']
    %13 = vsyncpa [#allocation3], 0
    %14 = vsyncpa [#allocation6], 0
    %15 = vsyncpa [#allocation9], 0
    %16 = vsyncpa [#allocation4], 0
    %17 = vsyncpa [#allocation13], 0
    // Predicated region
    $region2: #{tpu_custom_call.1} parent=1 // pred_check
      _
    $region3: #{tpu_custom_call.1} parent=1 // pred_check_branch
      %19 = sbr.rel (0) target = $region5
    $region4: #{tpu_custom_call.1} parent=1 // pred_region
      %21 = vsyncadd [#allocation3], 0
      %s22 = sshll.u32 %s0, 4
      %s23 = int_to_ptr.hbm [resolvable:$true] %s22
      %s24 = sshll.u32 [#allocation2], 4
      %s25 = int_to_ptr.vmem [resolvable:$true] %s24
      %30 = dma.hbm_to_vmem [thread:$0]  %s23, 512, %s25, [#allocation3], 128, 128, 8
    $region5: #{tpu_custom_call.1} parent=1 // pred_fallthru
      _
    // Predicated region
    $region6: #{tpu_custom_call.1} parent=1 // pred_check
      _
    $region7: #{tpu_custom_call.1} parent=1 // pred_check_branch
      %32 = sbr.rel (0) target = $region9
    $region8: #{tpu_custom_call.1} parent=1 // pred_region
      %34 = vsyncadd [#allocation6], 0
      %s36 = sshll.u32 %s1, 4
      %s37 = int_to_ptr.hbm [resolvable:$true] %s36
      %s38 = sshll.u32 [#allocation5], 4
      %s39 = int_to_ptr.vmem [resolvable:$true] %s38
      %41 = dma.hbm_to_vmem [thread:$0]  %s37, 16, %s39, [#allocation6]
    $region9: #{tpu_custom_call.1} parent=1 // pred_fallthru
      _
    // Predicated region
    $region10: #{tpu_custom_call.1} parent=1 // pred_check
      _
    $region11: #{tpu_custom_call.1} parent=1 // pred_check_branch
      %43 = sbr.rel (0) target = $region13
    $region12: #{tpu_custom_call.1} parent=1 // pred_region
      %45 = vsyncadd [#allocation6], 0
      %s46 = sshll.u32 %s2, 4
      %s47 = int_to_ptr.hbm [resolvable:$true] %s46
      %s48 = sshll.u32 [#allocation7], 4
      %s49 = int_to_ptr.vmem [resolvable:$true] %s48
      %54 = dma.hbm_to_vmem [thread:$0]  %s47, 512, %s49, [#allocation6], 128, 128, 8
    $region13: #{tpu_custom_call.1} parent=1 // pred_fallthru
      _
    // Predicated region
    $region14: #{tpu_custom_call.1} parent=1 // pred_check
      _
    $region15: #{tpu_custom_call.1} parent=1 // pred_check_branch
      %56 = sbr.rel (0) target = $region17
    $region16: #{tpu_custom_call.1} parent=1 // pred_region
      %58 = vsyncadd [#allocation9], 0
      %s59 = sshll.u32 %s3, 4
      %s60 = int_to_ptr.hbm [resolvable:$true] %s59
      %s61 = sshll.u32 [#allocation8], 4
      %s62 = int_to_ptr.vmem [resolvable:$true] %s61
      %67 = dma.hbm_to_vmem [thread:$0]  %s60, 512, %s62, [#allocation9], 128, 128, 8
    $region17: #{tpu_custom_call.1} parent=1 // pred_fallthru
      _
    // Predicated region
    $region18: #{tpu_custom_call.1} parent=1 // pred_check
      _
    $region19: #{tpu_custom_call.1} parent=1 // pred_check_branch
      %69 = sbr.rel (0) target = $region21
    $region20: #{tpu_custom_call.1} parent=1 // pred_region
      %71 = vsyncadd [#allocation9], 0
      %s72 = sshll.u32 %s4, 4
      %s73 = int_to_ptr.hbm [resolvable:$true] %s72
      %s74 = sshll.u32 [#allocation10], 4
      %s75 = int_to_ptr.vmem [resolvable:$true] %s74
      %80 = dma.hbm_to_vmem [thread:$0]  %s73, 512, %s75, [#allocation9], 128, 128, 8
    $region21: #{tpu_custom_call.1} parent=1 // pred_fallthru
      _
    // Predicated region
    $region22: #{tpu_custom_call.1} parent=1 // pred_check
      _
    $region23: #{tpu_custom_call.1} parent=1 // pred_check_branch
      %82 = sbr.rel (0) target = $region25
    $region24: #{tpu_custom_call.1} parent=1 // pred_region
      %84 = dma.done [#allocation3], 512
    $region25: #{tpu_custom_call.1} parent=1 // pred_fallthru
      _
    // Predicated region
    $region26: #{tpu_custom_call.1} parent=1 // pred_check
      _
    $region27: #{tpu_custom_call.1} parent=1 // pred_check_branch
      %86 = sbr.rel (0) target = $region29
    $region28: #{tpu_custom_call.1} parent=1 // pred_region
      %88 = dma.done [#allocation6], 16
    $region29: #{tpu_custom_call.1} parent=1 // pred_fallthru
      _
    // Predicated region
    $region30: #{tpu_custom_call.1} parent=1 // pred_check
      _
    $region31: #{tpu_custom_call.1} parent=1 // pred_check_branch
      %90 = sbr.rel (0) target = $region33
    $region32: #{tpu_custom_call.1} parent=1 // pred_region
      %92 = dma.done [#allocation6], 512
    $region33: #{tpu_custom_call.1} parent=1 // pred_fallthru
      _
    // Predicated region
    $region34: #{tpu_custom_call.1} parent=1 // pred_check
      _
    $region35: #{tpu_custom_call.1} parent=1 // pred_check_branch
      %94 = sbr.rel (0) target = $region37
    $region36: #{tpu_custom_call.1} parent=1 // pred_region
      %96 = dma.done [#allocation9], 512
    $region37: #{tpu_custom_call.1} parent=1 // pred_fallthru
      _
    // Predicated region
    $region38: #{tpu_custom_call.1} parent=1 // pred_check
      _
    $region39: #{tpu_custom_call.1} parent=1 // pred_check_branch
      %98 = sbr.rel (0) target = $region41
    $region40: #{tpu_custom_call.1} parent=1 // pred_region
      %100 = dma.done [#allocation9], 512
    $region41: #{tpu_custom_call.1} parent=1 // pred_fallthru
      _
    %v101 = vld [vmem:[#allocation2] sm:$0xff]
    %v102 = vld [vmem:[#allocation2 + $0x8] sm:$0xff]
    %v103 = vld [vmem:[#allocation2 + $0x10] sm:$0xff]
    %v104 = vld [vmem:[#allocation2 + $0x18] sm:$0xff]
    %v105 = vld [vmem:[#allocation5] sm:$0x1]
    %vm106 = vcmask 261120
    %v107 = vsel %vm106, %v101, 0.0
    %108 = vadd.xlane.f32.xlu0 %v107
    %v109 = vpop.xlane.xlu0 %108
    %v110 = vsel %vm106, %v102, 0.0
    %111 = vadd.xlane.f32.xlu0 %v110
    %v112 = vpop.xlane.xlu0 %111
    %v113 = vsel %vm106, %v103, 0.0
    %114 = vadd.xlane.f32.xlu0 %v113
    %v115 = vpop.xlane.xlu0 %114
    %v116 = vsel %vm106, %v104, 0.0
    %117 = vadd.xlane.f32.xlu0 %v116
    %v118 = vpop.xlane.xlu0 %117
    %v119 = vrcp.pop 32.0
    %v120 = vmul.f32 32.0, %v119
    %v121 = vsub.f32 1.0, %v120
    %v122 = vmul.f32 %v119, %v121
    %v123 = vadd.f32 %v119, %v122
    %vm124 = vweird.f32 %v119
    %v125 = vsel %vm124, %v119, %v123
    %v126 = vmul.f32 %v109, %v125
    %v127 = vmul.f32 %v112, %v125
    %v128 = vmul.f32 %v115, %v125
    %v129 = vmul.f32 %v118, %v125
    %v130 = vsub.f32 %v101, %v126
    %v131 = vsub.f32 %v102, %v127
    %v132 = vsub.f32 %v103, %v128
    %v133 = vsub.f32 %v104, %v129
    %v134 = vmul.f32 %v130, %v130
    %v135 = vmul.f32 %v131, %v131
    %v136 = vmul.f32 %v132, %v132
    %v137 = vmul.f32 %v133, %v133
    %v138 = vsel %vm106, %v134, 0.0
    %139 = vadd.xlane.f32.xlu0 %v138
    %v140 = vpop.xlane.xlu0 %139
    %v141 = vsel %vm106, %v135, 0.0
    %142 = vadd.xlane.f32.xlu0 %v141
    %v143 = vpop.xlane.xlu0 %142
    %v144 = vsel %vm106, %v136, 0.0
    %145 = vadd.xlane.f32.xlu0 %v144
    %v146 = vpop.xlane.xlu0 %145
    %v147 = vsel %vm106, %v137, 0.0
    %148 = vadd.xlane.f32.xlu0 %v147
    %v149 = vpop.xlane.xlu0 %148
    %v150 = vmul.f32 %v140, %v125
    %v151 = vmul.f32 %v143, %v125
    %v152 = vmul.f32 %v146, %v125
    %v153 = vmul.f32 %v149, %v125
    %v154 = vadd.f32 %v150, 1e-05
    %v155 = vadd.f32 %v151, 1e-05
    %v156 = vadd.f32 %v152, 1e-05
    %v157 = vadd.f32 %v153, 1e-05
    %v158 = vrsqrt.pop %v154
    %v159 = vmul.f32 %v158, %v154
    %v160 = vmul.f32 %v159, %v158
    %v161 = vmul.f32 0.5, %v160
    %v162 = vsub.f32 1.5, %v161
    %v163 = vmul.f32 %v158, %v162
    %vm164 = vweird.f32 %v154
    %vm165 = vweird.f32 %v158
    %vm166 = vmor %vm164, %vm165
    %v167 = vsel %vm166, %v158, %v163
    %v168 = vrsqrt.pop %v155
    %v169 = vmul.f32 %v168, %v155
    %v170 = vmul.f32 %v169, %v168
    %v171 = vmul.f32 0.5, %v170
    %v172 = vsub.f32 1.5, %v171
    %v173 = vmul.f32 %v168, %v172
    %vm174 = vweird.f32 %v155
    %vm175 = vweird.f32 %v168
    %vm176 = vmor %vm174, %vm175
    %v177 = vsel %vm176, %v168, %v173
    %v178 = vrsqrt.pop %v156
    %v179 = vmul.f32 %v178, %v156
    %v180 = vmul.f32 %v179, %v178
    %v181 = vmul.f32 0.5, %v180
    %v182 = vsub.f32 1.5, %v181
    %v183 = vmul.f32 %v178, %v182
    %vm184 = vweird.f32 %v156
    %vm185 = vweird.f32 %v178
    %vm186 = vmor %vm184, %vm185
    %v187 = vsel %vm186, %v178, %v183
    %v188 = vrsqrt.pop %v157
    %v189 = vmul.f32 %v188, %v157
    %v190 = vmul.f32 %v189, %v188
    %v191 = vmul.f32 0.5, %v190
    %v192 = vsub.f32 1.5, %v191
    %v193 = vmul.f32 %v188, %v192
    %vm194 = vweird.f32 %v157
    %vm195 = vweird.f32 %v188
    %vm196 = vmor %vm194, %vm195
    %v197 = vsel %vm196, %v188, %v193
    %v198 = vmul.f32 %v130, %v167
    %v199 = vmul.f32 %v131, %v177
    %v200 = vmul.f32 %v132, %v187
    %v201 = vmul.f32 %v133, %v197
    %v203 = vperm.slane %v105, 0
    %v205 = vmul.f32 %v198, %v203
    %v206 = vmul.f32 %v199, %v203
    %v207 = vmul.f32 %v200, %v203
    %v208 = vmul.f32 %v201, %v203
    %v209 = vadd.f32 %v205, 0.0
    %v210 = vadd.f32 %v206, 0.0
    %v211 = vadd.f32 %v207, 0.0
    %v212 = vadd.f32 %v208, 0.0
    %v213 = vld [vmem:[#allocation7] sm:$0xff]
    %v214 = vld [vmem:[#allocation7 + $0x8] sm:$0xff]
    %v215 = vld [vmem:[#allocation7 + $0x10] sm:$0xff]
    %v216 = vld [vmem:[#allocation7 + $0x18] sm:$0xff]
    %v218 = vsel %vm106, %v209, 0
    %v221 = vsel %vm106, %v210, 0
    %v224 = vsel %vm106, %v211, 0
    %v227 = vsel %vm106, %v212, 0
    %229 = vmatpush.msra.mxu0 0.0
    %230 = vmatpush.msra.mxu0 0.0
    %231 = vmatpush.msra.mxu0 0.0
    %232 = vmatpush.msra.mxu0 0.0
    %233 = vmatpush.msra.mxu0 0.0
    %234 = vmatpush.msra.mxu0 0.0
    %235 = vmatpush.msra.mxu0 0.0
    %236 = vmatpush.msra.mxu0 0.0
    %237 = vmatpush.msra.mxu0 0.0
    %238 = vmatpush.msra.mxu0 0.0
    %239 = vmatpush.msra.mxu0 0.0
    %240 = vmatpush.msra.mxu0 0.0
    %241 = vmatpush.msra.mxu0 %v216
    %242 = vmatpush.msra.mxu0 %v215
    %243 = vmatpush.msra.mxu0 %v214
    %244 = vmatpush.msra.mxu0 %v213
    %245 = vmatmul.f32.gmra.mxu0 %v218
    %v246 = vpop.f32.mrf.mxu0
    %v247 = vadd.f32 0.0, %v246
    %248 = vmatmul.f32.gmra.mxu0 %v221
    %v249 = vpop.f32.mrf.mxu0
    %v250 = vadd.f32 0.0, %v249
    %251 = vmatmul.f32.gmra.mxu0 %v224
    %v252 = vpop.f32.mrf.mxu0
    %v253 = vadd.f32 0.0, %v252
    %254 = vmatmul.f32.gmra.mxu0 %v227
    %v255 = vpop.f32.mrf.mxu0
    %v256 = vadd.f32 0.0, %v255
    %257 = vdwg.mxu0
    %v258 = vld [vmem:[#allocation8] sm:$0xff]
    %v259 = vld [vmem:[#allocation8 + $0x8] sm:$0xff]
    %v260 = vld [vmem:[#allocation8 + $0x10] sm:$0xff]
    %v261 = vld [vmem:[#allocation8 + $0x18] sm:$0xff]
    %262 = vmatpush.msra.mxu0 0.0
    %263 = vmatpush.msra.mxu0 0.0
    %264 = vmatpush.msra.mxu0 0.0
    %265 = vmatpush.msra.mxu0 0.0
    %266 = vmatpush.msra.mxu0 0.0
    %267 = vmatpush.msra.mxu0 0.0
    %268 = vmatpush.msra.mxu0 0.0
    %269 = vmatpush.msra.mxu0 0.0
    %270 = vmatpush.msra.mxu0 0.0
    %271 = vmatpush.msra.mxu0 0.0
    %272 = vmatpush.msra.mxu0 0.0
    %273 = vmatpush.msra.mxu0 0.0
    %274 = vmatpush.msra.mxu0 %v261
    %275 = vmatpush.msra.mxu0 %v260
    %276 = vmatpush.msra.mxu0 %v259
    %277 = vmatpush.msra.mxu0 %v258
    %278 = vmatmul.f32.gmra.mxu0 %v218
    %v279 = vpop.f32.mrf.mxu0
    %v280 = vadd.f32 0.0, %v279
    %281 = vmatmul.f32.gmra.mxu0 %v221
    %v282 = vpop.f32.mrf.mxu0
    %v283 = vadd.f32 0.0, %v282
    %284 = vmatmul.f32.gmra.mxu0 %v224
    %v285 = vpop.f32.mrf.mxu0
    %v286 = vadd.f32 0.0, %v285
    %287 = vmatmul.f32.gmra.mxu0 %v227
    %v288 = vpop.f32.mrf.mxu0
    %v289 = vadd.f32 0.0, %v288
    %290 = vdwg.mxu0
    %v291 = vld [vmem:[#allocation10] sm:$0xff]
    %v292 = vld [vmem:[#allocation10 + $0x8] sm:$0xff]
    %v293 = vld [vmem:[#allocation10 + $0x10] sm:$0xff]
    %v294 = vld [vmem:[#allocation10 + $0x18] sm:$0xff]
    %295 = vmatpush.msra.mxu0 0.0
    %296 = vmatpush.msra.mxu0 0.0
    %297 = vmatpush.msra.mxu0 0.0
    %298 = vmatpush.msra.mxu0 0.0
    %299 = vmatpush.msra.mxu0 0.0
    %300 = vmatpush.msra.mxu0 0.0
    %301 = vmatpush.msra.mxu0 0.0
    %302 = vmatpush.msra.mxu0 0.0
    %303 = vmatpush.msra.mxu0 0.0
    %304 = vmatpush.msra.mxu0 0.0
    %305 = vmatpush.msra.mxu0 0.0
    %306 = vmatpush.msra.mxu0 0.0
    %307 = vmatpush.msra.mxu0 %v294
    %308 = vmatpush.msra.mxu0 %v293
    %309 = vmatpush.msra.mxu0 %v292
    %310 = vmatpush.msra.mxu0 %v291
    %311 = vmatmul.f32.gmra.mxu0 %v218
    %v312 = vpop.f32.mrf.mxu0
    %v313 = vadd.f32 0.0, %v312
    %314 = vmatmul.f32.gmra.mxu0 %v221
    %v315 = vpop.f32.mrf.mxu0
    %v316 = vadd.f32 0.0, %v315
    %317 = vmatmul.f32.gmra.mxu0 %v224
    %v318 = vpop.f32.mrf.mxu0
    %v319 = vadd.f32 0.0, %v318
    %320 = vmatmul.f32.gmra.mxu0 %v227
    %v321 = vpop.f32.mrf.mxu0
    %v322 = vadd.f32 0.0, %v321
    %323 = vdwg.mxu0
    %v324 = vmul.f32 %v247, %v247
    %v325 = vmul.f32 %v250, %v250
    %v326 = vmul.f32 %v253, %v253
    %v327 = vmul.f32 %v256, %v256
    %vm328 = vcmask 130048
    %v329 = vsel %vm328, %v324, 0.0
    %330 = vadd.xlane.f32.xlu0 %v329
    %v331 = vpop.xlane.xlu0 %330
    %v332 = vsel %vm328, %v325, 0.0
    %333 = vadd.xlane.f32.xlu0 %v332
    %v334 = vpop.xlane.xlu0 %333
    %v335 = vsel %vm328, %v326, 0.0
    %336 = vadd.xlane.f32.xlu0 %v335
    %v337 = vpop.xlane.xlu0 %336
    %v338 = vsel %vm328, %v327, 0.0
    %339 = vadd.xlane.f32.xlu0 %v338
    %v340 = vpop.xlane.xlu0 %339
    %v341 = vrsqrt.pop %v331
    %v342 = vmul.f32 %v341, %v331
    %v343 = vmul.f32 %v342, %v341
    %v344 = vmul.f32 0.5, %v343
    %v345 = vsub.f32 1.5, %v344
    %v346 = vmul.f32 %v341, %v345
    %v347 = vmul.f32 %v331, %v346
    %vm348 = vcmp.eq.f32.partialorder %v331, inf
    %v349 = vsel %vm348, %v331, %v347
    %vm350 = vcmp.eq.f32.partialorder %v331, 0.0
    %v351 = vand.u32 %v331, 2147483648
    %v352 = vsel %vm350, %v351, %v349
    %v353 = vrsqrt.pop %v334
    %v354 = vmul.f32 %v353, %v334
    %v355 = vmul.f32 %v354, %v353
    %v356 = vmul.f32 0.5, %v355
    %v357 = vsub.f32 1.5, %v356
    %v358 = vmul.f32 %v353, %v357
    %v359 = vmul.f32 %v334, %v358
    %vm360 = vcmp.eq.f32.partialorder %v334, inf
    %v361 = vsel %vm360, %v334, %v359
    %vm362 = vcmp.eq.f32.partialorder %v334, 0.0
    %v363 = vand.u32 %v334, 2147483648
    %v364 = vsel %vm362, %v363, %v361
    %v365 = vrsqrt.pop %v337
    %v366 = vmul.f32 %v365, %v337
    %v367 = vmul.f32 %v366, %v365
    %v368 = vmul.f32 0.5, %v367
    %v369 = vsub.f32 1.5, %v368
    %v370 = vmul.f32 %v365, %v369
    %v371 = vmul.f32 %v337, %v370
    %vm372 = vcmp.eq.f32.partialorder %v337, inf
    %v373 = vsel %vm372, %v337, %v371
    %vm374 = vcmp.eq.f32.partialorder %v337, 0.0
    %v375 = vand.u32 %v337, 2147483648
    %v376 = vsel %vm374, %v375, %v373
    %v377 = vrsqrt.pop %v340
    %v378 = vmul.f32 %v377, %v340
    %v379 = vmul.f32 %v378, %v377
    %v380 = vmul.f32 0.5, %v379
    %v381 = vsub.f32 1.5, %v380
    %v382 = vmul.f32 %v377, %v381
    %v383 = vmul.f32 %v340, %v382
    %vm384 = vcmp.eq.f32.partialorder %v340, inf
    %v385 = vsel %vm384, %v340, %v383
    %vm386 = vcmp.eq.f32.partialorder %v340, 0.0
    %v387 = vand.u32 %v340, 2147483648
    %v388 = vsel %vm386, %v387, %v385
    %v389 = vmax.f32 %v352, 1e-12
    %v390 = vmax.f32 %v364, 1e-12
    %v391 = vmax.f32 %v376, 1e-12
    %v392 = vmax.f32 %v388, 1e-12
    %v393 = vrcp.pop %v389
    %v394 = vmul.f32 %v389, %v393
    %v395 = vsub.f32 1.0, %v394
    %v396 = vmul.f32 %v393, %v395
    %v397 = vadd.f32 %v393, %v396
    %vm398 = vweird.f32 %v389
    %vm399 = vweird.f32 %v393
    %vm400 = vmor %vm398, %vm399
    %v401 = vsel %vm400, %v393, %v397
    %v402 = vand.u32 2147483647, %v389
    %vm403 = vcmp.eq.f32.partialorder %v402, 8.507059e+37
    %v404 = vand.u32 %v389, 2147483648
    %v405 = vor.u32 1.1754944e-38, %v404
    %v406 = vsel %vm403, %v405, %v401
    %v407 = vmul.f32 1.0, %v406
    %v408 = vrcp.pop %v390
    %v409 = vmul.f32 %v390, %v408
    %v410 = vsub.f32 1.0, %v409
    %v411 = vmul.f32 %v408, %v410
    %v412 = vadd.f32 %v408, %v411
    %vm413 = vweird.f32 %v390
    %vm414 = vweird.f32 %v408
    %vm415 = vmor %vm413, %vm414
    %v416 = vsel %vm415, %v408, %v412
    %v417 = vand.u32 2147483647, %v390
    %vm418 = vcmp.eq.f32.partialorder %v417, 8.507059e+37
    %v419 = vand.u32 %v390, 2147483648
    %v420 = vor.u32 1.1754944e-38, %v419
    %v421 = vsel %vm418, %v420, %v416
    %v422 = vmul.f32 1.0, %v421
    %v423 = vrcp.pop %v391
    %v424 = vmul.f32 %v391, %v423
    %v425 = vsub.f32 1.0, %v424
    %v426 = vmul.f32 %v423, %v425
    %v427 = vadd.f32 %v423, %v426
    %vm428 = vweird.f32 %v391
    %vm429 = vweird.f32 %v423
    %vm430 = vmor %vm428, %vm429
    %v431 = vsel %vm430, %v423, %v427
    %v432 = vand.u32 2147483647, %v391
    %vm433 = vcmp.eq.f32.partialorder %v432, 8.507059e+37
    %v434 = vand.u32 %v391, 2147483648
    %v435 = vor.u32 1.1754944e-38, %v434
    %v436 = vsel %vm433, %v435, %v431
    %v437 = vmul.f32 1.0, %v436
    %v438 = vrcp.pop %v392
    %v439 = vmul.f32 %v392, %v438
    %v440 = vsub.f32 1.0, %v439
    %v441 = vmul.f32 %v438, %v440
    %v442 = vadd.f32 %v438, %v441
    %vm443 = vweird.f32 %v392
    %vm444 = vweird.f32 %v438
    %vm445 = vmor %vm443, %vm444
    %v446 = vsel %vm445, %v438, %v442
    %v447 = vand.u32 2147483647, %v392
    %vm448 = vcmp.eq.f32.partialorder %v447, 8.507059e+37
    %v449 = vand.u32 %v392, 2147483648
    %v450 = vor.u32 1.1754944e-38, %v449
    %v451 = vsel %vm448, %v450, %v446
    %v452 = vmul.f32 1.0, %v451
    %v453 = vmul.f32 %v247, %v407
    %v454 = vmul.f32 %v250, %v422
    %v455 = vmul.f32 %v253, %v437
    %v456 = vmul.f32 %v256, %v452
    %461 = vrot.lane.b32.xlu0 %v324, 112
    %v462 = vpop.permute.xlu0 %461
    %463 = vrot.lane.b32.xlu0 %v325, 112
    %v464 = vpop.permute.xlu0 %463
    %465 = vrot.lane.b32.xlu0 %v326, 112
    %v466 = vpop.permute.xlu0 %465
    %467 = vrot.lane.b32.xlu0 %v327, 112
    %v468 = vpop.permute.xlu0 %467
    %v473 = vsel %vm328, %v462, 0.0
    %474 = vadd.xlane.f32.xlu0 %v473
    %v475 = vpop.xlane.xlu0 %474
    %v476 = vsel %vm328, %v464, 0.0
    %477 = vadd.xlane.f32.xlu0 %v476
    %v478 = vpop.xlane.xlu0 %477
    %v479 = vsel %vm328, %v466, 0.0
    %480 = vadd.xlane.f32.xlu0 %v479
    %v481 = vpop.xlane.xlu0 %480
    %v482 = vsel %vm328, %v468, 0.0
    %483 = vadd.xlane.f32.xlu0 %v482
    %v484 = vpop.xlane.xlu0 %483
    %v485 = vrsqrt.pop %v475
    %v486 = vmul.f32 %v485, %v475
    %v487 = vmul.f32 %v486, %v485
    %v488 = vmul.f32 0.5, %v487
    %v489 = vsub.f32 1.5, %v488
    %v490 = vmul.f32 %v485, %v489
    %v491 = vmul.f32 %v475, %v490
    %vm492 = vcmp.eq.f32.partialorder %v475, inf
    %v493 = vsel %vm492, %v475, %v491
    %vm494 = vcmp.eq.f32.partialorder %v475, 0.0
    %v495 = vand.u32 %v475, 2147483648
    %v496 = vsel %vm494, %v495, %v493
    %v497 = vrsqrt.pop %v478
    %v498 = vmul.f32 %v497, %v478
    %v499 = vmul.f32 %v498, %v497
    %v500 = vmul.f32 0.5, %v499
    %v501 = vsub.f32 1.5, %v500
    %v502 = vmul.f32 %v497, %v501
    %v503 = vmul.f32 %v478, %v502
    %vm504 = vcmp.eq.f32.partialorder %v478, inf
    %v505 = vsel %vm504, %v478, %v503
    %vm506 = vcmp.eq.f32.partialorder %v478, 0.0
    %v507 = vand.u32 %v478, 2147483648
    %v508 = vsel %vm506, %v507, %v505
    %v509 = vrsqrt.pop %v481
    %v510 = vmul.f32 %v509, %v481
    %v511 = vmul.f32 %v510, %v509
    %v512 = vmul.f32 0.5, %v511
    %v513 = vsub.f32 1.5, %v512
    %v514 = vmul.f32 %v509, %v513
    %v515 = vmul.f32 %v481, %v514
    %vm516 = vcmp.eq.f32.partialorder %v481, inf
    %v517 = vsel %vm516, %v481, %v515
    %vm518 = vcmp.eq.f32.partialorder %v481, 0.0
    %v519 = vand.u32 %v481, 2147483648
    %v520 = vsel %vm518, %v519, %v517
    %v521 = vrsqrt.pop %v484
    %v522 = vmul.f32 %v521, %v484
    %v523 = vmul.f32 %v522, %v521
    %v524 = vmul.f32 0.5, %v523
    %v525 = vsub.f32 1.5, %v524
    %v526 = vmul.f32 %v521, %v525
    %v527 = vmul.f32 %v484, %v526
    %vm528 = vcmp.eq.f32.partialorder %v484, inf
    %v529 = vsel %vm528, %v484, %v527
    %vm530 = vcmp.eq.f32.partialorder %v484, 0.0
    %v531 = vand.u32 %v484, 2147483648
    %v532 = vsel %vm530, %v531, %v529
    %v533 = vmax.f32 %v496, 1e-12
    %v534 = vmax.f32 %v508, 1e-12
    %v535 = vmax.f32 %v520, 1e-12
    %v536 = vmax.f32 %v532, 1e-12
    %v537 = vrcp.pop %v533
    %v538 = vmul.f32 %v533, %v537
    %v539 = vsub.f32 1.0, %v538
    %v540 = vmul.f32 %v537, %v539
    %v541 = vadd.f32 %v537, %v540
    %vm542 = vweird.f32 %v533
    %vm543 = vweird.f32 %v537
    %vm544 = vmor %vm542, %vm543
    %v545 = vsel %vm544, %v537, %v541
    %v546 = vand.u32 2147483647, %v533
    %vm547 = vcmp.eq.f32.partialorder %v546, 8.507059e+37
    %v548 = vand.u32 %v533, 2147483648
    %v549 = vor.u32 1.1754944e-38, %v548
    %v550 = vsel %vm547, %v549, %v545
    %v551 = vmul.f32 1.0, %v550
    %v552 = vrcp.pop %v534
    %v553 = vmul.f32 %v534, %v552
    %v554 = vsub.f32 1.0, %v553
    %v555 = vmul.f32 %v552, %v554
    %v556 = vadd.f32 %v552, %v555
    %vm557 = vweird.f32 %v534
    %vm558 = vweird.f32 %v552
    %vm559 = vmor %vm557, %vm558
    %v560 = vsel %vm559, %v552, %v556
    %v561 = vand.u32 2147483647, %v534
    %vm562 = vcmp.eq.f32.partialorder %v561, 8.507059e+37
    %v563 = vand.u32 %v534, 2147483648
    %v564 = vor.u32 1.1754944e-38, %v563
    %v565 = vsel %vm562, %v564, %v560
    %v566 = vmul.f32 1.0, %v565
    %v567 = vrcp.pop %v535
    %v568 = vmul.f32 %v535, %v567
    %v569 = vsub.f32 1.0, %v568
    %v570 = vmul.f32 %v567, %v569
    %v571 = vadd.f32 %v567, %v570
    %vm572 = vweird.f32 %v535
    %vm573 = vweird.f32 %v567
    %vm574 = vmor %vm572, %vm573
    %v575 = vsel %vm574, %v567, %v571
    %v576 = vand.u32 2147483647, %v535
    %vm577 = vcmp.eq.f32.partialorder %v576, 8.507059e+37
    %v578 = vand.u32 %v535, 2147483648
    %v579 = vor.u32 1.1754944e-38, %v578
    %v580 = vsel %vm577, %v579, %v575
    %v581 = vmul.f32 1.0, %v580
    %v582 = vrcp.pop %v536
    %v583 = vmul.f32 %v536, %v582
    %v584 = vsub.f32 1.0, %v583
    %v585 = vmul.f32 %v582, %v584
    %v586 = vadd.f32 %v582, %v585
    %vm587 = vweird.f32 %v536
    %vm588 = vweird.f32 %v582
    %vm589 = vmor %vm587, %vm588
    %v590 = vsel %vm589, %v582, %v586
    %v591 = vand.u32 2147483647, %v536
    %vm592 = vcmp.eq.f32.partialorder %v591, 8.507059e+37
    %v593 = vand.u32 %v536, 2147483648
    %v594 = vor.u32 1.1754944e-38, %v593
    %v595 = vsel %vm592, %v594, %v590
    %v596 = vmul.f32 1.0, %v595
    %v597 = vmul.f32 %v247, %v551
    %v598 = vmul.f32 %v250, %v566
    %v599 = vmul.f32 %v253, %v581
    %v600 = vmul.f32 %v256, %v596
    %601 = vrot.lane.b32.xlu0 %v324, 96
    %v602 = vpop.permute.xlu0 %601
    %603 = vrot.lane.b32.xlu0 %v325, 96
    %v604 = vpop.permute.xlu0 %603
    %605 = vrot.lane.b32.xlu0 %v326, 96
    %v606 = vpop.permute.xlu0 %605
    %607 = vrot.lane.b32.xlu0 %v327, 96
    %v608 = vpop.permute.xlu0 %607
    %v613 = vsel %vm328, %v602, 0.0
    %614 = vadd.xlane.f32.xlu0 %v613
    %v615 = vpop.xlane.xlu0 %614
    %v616 = vsel %vm328, %v604, 0.0
    %617 = vadd.xlane.f32.xlu0 %v616
    %v618 = vpop.xlane.xlu0 %617
    %v619 = vsel %vm328, %v606, 0.0
    %620 = vadd.xlane.f32.xlu0 %v619
    %v621 = vpop.xlane.xlu0 %620
    %v622 = vsel %vm328, %v608, 0.0
    %623 = vadd.xlane.f32.xlu0 %v622
    %v624 = vpop.xlane.xlu0 %623
    %v625 = vrsqrt.pop %v615
    %v626 = vmul.f32 %v625, %v615
    %v627 = vmul.f32 %v626, %v625
    %v628 = vmul.f32 0.5, %v627
    %v629 = vsub.f32 1.5, %v628
    %v630 = vmul.f32 %v625, %v629
    %v631 = vmul.f32 %v615, %v630
    %vm632 = vcmp.eq.f32.partialorder %v615, inf
    %v633 = vsel %vm632, %v615, %v631
    %vm634 = vcmp.eq.f32.partialorder %v615, 0.0
    %v635 = vand.u32 %v615, 2147483648
    %v636 = vsel %vm634, %v635, %v633
    %v637 = vrsqrt.pop %v618
    %v638 = vmul.f32 %v637, %v618
    %v639 = vmul.f32 %v638, %v637
    %v640 = vmul.f32 0.5, %v639
    %v641 = vsub.f32 1.5, %v640
    %v642 = vmul.f32 %v637, %v641
    %v643 = vmul.f32 %v618, %v642
    %vm644 = vcmp.eq.f32.partialorder %v618, inf
    %v645 = vsel %vm644, %v618, %v643
    %vm646 = vcmp.eq.f32.partialorder %v618, 0.0
    %v647 = vand.u32 %v618, 2147483648
    %v648 = vsel %vm646, %v647, %v645
    %v649 = vrsqrt.pop %v621
    %v650 = vmul.f32 %v649, %v621
    %v651 = vmul.f32 %v650, %v649
    %v652 = vmul.f32 0.5, %v651
    %v653 = vsub.f32 1.5, %v652
    %v654 = vmul.f32 %v649, %v653
    %v655 = vmul.f32 %v621, %v654
    %vm656 = vcmp.eq.f32.partialorder %v621, inf
    %v657 = vsel %vm656, %v621, %v655
    %vm658 = vcmp.eq.f32.partialorder %v621, 0.0
    %v659 = vand.u32 %v621, 2147483648
    %v660 = vsel %vm658, %v659, %v657
    %v661 = vrsqrt.pop %v624
    %v662 = vmul.f32 %v661, %v624
    %v663 = vmul.f32 %v662, %v661
    %v664 = vmul.f32 0.5, %v663
    %v665 = vsub.f32 1.5, %v664
    %v666 = vmul.f32 %v661, %v665
    %v667 = vmul.f32 %v624, %v666
    %vm668 = vcmp.eq.f32.partialorder %v624, inf
    %v669 = vsel %vm668, %v624, %v667
    %vm670 = vcmp.eq.f32.partialorder %v624, 0.0
    %v671 = vand.u32 %v624, 2147483648
    %v672 = vsel %vm670, %v671, %v669
    %v673 = vmax.f32 %v636, 1e-12
    %v674 = vmax.f32 %v648, 1e-12
    %v675 = vmax.f32 %v660, 1e-12
    %v676 = vmax.f32 %v672, 1e-12
    %v677 = vrcp.pop %v673
    %v678 = vmul.f32 %v673, %v677
    %v679 = vsub.f32 1.0, %v678
    %v680 = vmul.f32 %v677, %v679
    %v681 = vadd.f32 %v677, %v680
    %vm682 = vweird.f32 %v673
    %vm683 = vweird.f32 %v677
    %vm684 = vmor %vm682, %vm683
    %v685 = vsel %vm684, %v677, %v681
    %v686 = vand.u32 2147483647, %v673
    %vm687 = vcmp.eq.f32.partialorder %v686, 8.507059e+37
    %v688 = vand.u32 %v673, 2147483648
    %v689 = vor.u32 1.1754944e-38, %v688
    %v690 = vsel %vm687, %v689, %v685
    %v691 = vmul.f32 1.0, %v690
    %v692 = vrcp.pop %v674
    %v693 = vmul.f32 %v674, %v692
    %v694 = vsub.f32 1.0, %v693
    %v695 = vmul.f32 %v692, %v694
    %v696 = vadd.f32 %v692, %v695
    %vm697 = vweird.f32 %v674
    %vm698 = vweird.f32 %v692
    %vm699 = vmor %vm697, %vm698
    %v700 = vsel %vm699, %v692, %v696
    %v701 = vand.u32 2147483647, %v674
    %vm702 = vcmp.eq.f32.partialorder %v701, 8.507059e+37
    %v703 = vand.u32 %v674, 2147483648
    %v704 = vor.u32 1.1754944e-38, %v703
    %v705 = vsel %vm702, %v704, %v700
    %v706 = vmul.f32 1.0, %v705
    %v707 = vrcp.pop %v675
    %v708 = vmul.f32 %v675, %v707
    %v709 = vsub.f32 1.0, %v708
    %v710 = vmul.f32 %v707, %v709
    %v711 = vadd.f32 %v707, %v710
    %vm712 = vweird.f32 %v675
    %vm713 = vweird.f32 %v707
    %vm714 = vmor %vm712, %vm713
    %v715 = vsel %vm714, %v707, %v711
    %v716 = vand.u32 2147483647, %v675
    %vm717 = vcmp.eq.f32.partialorder %v716, 8.507059e+37
    %v718 = vand.u32 %v675, 2147483648
    %v719 = vor.u32 1.1754944e-38, %v718
    %v720 = vsel %vm717, %v719, %v715
    %v721 = vmul.f32 1.0, %v720
    %v722 = vrcp.pop %v676
    %v723 = vmul.f32 %v676, %v722
    %v724 = vsub.f32 1.0, %v723
    %v725 = vmul.f32 %v722, %v724
    %v726 = vadd.f32 %v722, %v725
    %vm727 = vweird.f32 %v676
    %vm728 = vweird.f32 %v722
    %vm729 = vmor %vm727, %vm728
    %v730 = vsel %vm729, %v722, %v726
    %v731 = vand.u32 2147483647, %v676
    %vm732 = vcmp.eq.f32.partialorder %v731, 8.507059e+37
    %v733 = vand.u32 %v676, 2147483648
    %v734 = vor.u32 1.1754944e-38, %v733
    %v735 = vsel %vm732, %v734, %v730
    %v736 = vmul.f32 1.0, %v735
    %v737 = vmul.f32 %v247, %v691
    %v738 = vmul.f32 %v250, %v706
    %v739 = vmul.f32 %v253, %v721
    %v740 = vmul.f32 %v256, %v736
    %741 = vrot.lane.b32.xlu0 %v324, 80
    %v742 = vpop.permute.xlu0 %741
    %743 = vrot.lane.b32.xlu0 %v325, 80
    %v744 = vpop.permute.xlu0 %743
    %745 = vrot.lane.b32.xlu0 %v326, 80
    %v746 = vpop.permute.xlu0 %745
    %747 = vrot.lane.b32.xlu0 %v327, 80
    %v748 = vpop.permute.xlu0 %747
    %v753 = vsel %vm328, %v742, 0.0
    %754 = vadd.xlane.f32.xlu0 %v753
    %v755 = vpop.xlane.xlu0 %754
    %v756 = vsel %vm328, %v744, 0.0
    %757 = vadd.xlane.f32.xlu0 %v756
    %v758 = vpop.xlane.xlu0 %757
    %v759 = vsel %vm328, %v746, 0.0
    %760 = vadd.xlane.f32.xlu0 %v759
    %v761 = vpop.xlane.xlu0 %760
    %v762 = vsel %vm328, %v748, 0.0
    %763 = vadd.xlane.f32.xlu0 %v762
    %v764 = vpop.xlane.xlu0 %763
    %v765 = vrsqrt.pop %v755
    %v766 = vmul.f32 %v765, %v755
    %v767 = vmul.f32 %v766, %v765
    %v768 = vmul.f32 0.5, %v767
    %v769 = vsub.f32 1.5, %v768
    %v770 = vmul.f32 %v765, %v769
    %v771 = vmul.f32 %v755, %v770
    %vm772 = vcmp.eq.f32.partialorder %v755, inf
    %v773 = vsel %vm772, %v755, %v771
    %vm774 = vcmp.eq.f32.partialorder %v755, 0.0
    %v775 = vand.u32 %v755, 2147483648
    %v776 = vsel %vm774, %v775, %v773
    %v777 = vrsqrt.pop %v758
    %v778 = vmul.f32 %v777, %v758
    %v779 = vmul.f32 %v778, %v777
    %v780 = vmul.f32 0.5, %v779
    %v781 = vsub.f32 1.5, %v780
    %v782 = vmul.f32 %v777, %v781
    %v783 = vmul.f32 %v758, %v782
    %vm784 = vcmp.eq.f32.partialorder %v758, inf
    %v785 = vsel %vm784, %v758, %v783
    %vm786 = vcmp.eq.f32.partialorder %v758, 0.0
    %v787 = vand.u32 %v758, 2147483648
    %v788 = vsel %vm786, %v787, %v785
    %v789 = vrsqrt.pop %v761
    %v790 = vmul.f32 %v789, %v761
    %v791 = vmul.f32 %v790, %v789
    %v792 = vmul.f32 0.5, %v791
    %v793 = vsub.f32 1.5, %v792
    %v794 = vmul.f32 %v789, %v793
    %v795 = vmul.f32 %v761, %v794
    %vm796 = vcmp.eq.f32.partialorder %v761, inf
    %v797 = vsel %vm796, %v761, %v795
    %vm798 = vcmp.eq.f32.partialorder %v761, 0.0
    %v799 = vand.u32 %v761, 2147483648
    %v800 = vsel %vm798, %v799, %v797
    %v801 = vrsqrt.pop %v764
    %v802 = vmul.f32 %v801, %v764
    %v803 = vmul.f32 %v802, %v801
    %v804 = vmul.f32 0.5, %v803
    %v805 = vsub.f32 1.5, %v804
    %v806 = vmul.f32 %v801, %v805
    %v807 = vmul.f32 %v764, %v806
    %vm808 = vcmp.eq.f32.partialorder %v764, inf
    %v809 = vsel %vm808, %v764, %v807
    %vm810 = vcmp.eq.f32.partialorder %v764, 0.0
    %v811 = vand.u32 %v764, 2147483648
    %v812 = vsel %vm810, %v811, %v809
    %v813 = vmax.f32 %v776, 1e-12
    %v814 = vmax.f32 %v788, 1e-12
    %v815 = vmax.f32 %v800, 1e-12
    %v816 = vmax.f32 %v812, 1e-12
    %v817 = vrcp.pop %v813
    %v818 = vmul.f32 %v813, %v817
    %v819 = vsub.f32 1.0, %v818
    %v820 = vmul.f32 %v817, %v819
    %v821 = vadd.f32 %v817, %v820
    %vm822 = vweird.f32 %v813
    %vm823 = vweird.f32 %v817
    %vm824 = vmor %vm822, %vm823
    %v825 = vsel %vm824, %v817, %v821
    %v826 = vand.u32 2147483647, %v813
    %vm827 = vcmp.eq.f32.partialorder %v826, 8.507059e+37
    %v828 = vand.u32 %v813, 2147483648
    %v829 = vor.u32 1.1754944e-38, %v828
    %v830 = vsel %vm827, %v829, %v825
    %v831 = vmul.f32 1.0, %v830
    %v832 = vrcp.pop %v814
    %v833 = vmul.f32 %v814, %v832
    %v834 = vsub.f32 1.0, %v833
    %v835 = vmul.f32 %v832, %v834
    %v836 = vadd.f32 %v832, %v835
    %vm837 = vweird.f32 %v814
    %vm838 = vweird.f32 %v832
    %vm839 = vmor %vm837, %vm838
    %v840 = vsel %vm839, %v832, %v836
    %v841 = vand.u32 2147483647, %v814
    %vm842 = vcmp.eq.f32.partialorder %v841, 8.507059e+37
    %v843 = vand.u32 %v814, 2147483648
    %v844 = vor.u32 1.1754944e-38, %v843
    %v845 = vsel %vm842, %v844, %v840
    %v846 = vmul.f32 1.0, %v845
    %v847 = vrcp.pop %v815
    %v848 = vmul.f32 %v815, %v847
    %v849 = vsub.f32 1.0, %v848
    %v850 = vmul.f32 %v847, %v849
    %v851 = vadd.f32 %v847, %v850
    %vm852 = vweird.f32 %v815
    %vm853 = vweird.f32 %v847
    %vm854 = vmor %vm852, %vm853
    %v855 = vsel %vm854, %v847, %v851
    %v856 = vand.u32 2147483647, %v815
    %vm857 = vcmp.eq.f32.partialorder %v856, 8.507059e+37
    %v858 = vand.u32 %v815, 2147483648
    %v859 = vor.u32 1.1754944e-38, %v858
    %v860 = vsel %vm857, %v859, %v855
    %v861 = vmul.f32 1.0, %v860
    %v862 = vrcp.pop %v816
    %v863 = vmul.f32 %v816, %v862
    %v864 = vsub.f32 1.0, %v863
    %v865 = vmul.f32 %v862, %v864
    %v866 = vadd.f32 %v862, %v865
    %vm867 = vweird.f32 %v816
    %vm868 = vweird.f32 %v862
    %vm869 = vmor %vm867, %vm868
    %v870 = vsel %vm869, %v862, %v866
    %v871 = vand.u32 2147483647, %v816
    %vm872 = vcmp.eq.f32.partialorder %v871, 8.507059e+37
    %v873 = vand.u32 %v816, 2147483648
    %v874 = vor.u32 1.1754944e-38, %v873
    %v875 = vsel %vm872, %v874, %v870
    %v876 = vmul.f32 1.0, %v875
    %v877 = vmul.f32 %v247, %v831
    %v878 = vmul.f32 %v250, %v846
    %v879 = vmul.f32 %v253, %v861
    %v880 = vmul.f32 %v256, %v876
    %v881 = vsel %vm328, %v453, %v597
    %v882 = vsel %vm328, %v454, %v598
    %v883 = vsel %vm328, %v455, %v599
    %v884 = vsel %vm328, %v456, %v600
    %v885 = vsel %vm106, %v881, %v737
    %v886 = vsel %vm106, %v882, %v738
    %v887 = vsel %vm106, %v883, %v739
    %v888 = vsel %vm106, %v884, %v740
    %vm889 = vcmask 392192
    %v890 = vsel %vm889, %v885, %v877
    %v891 = vsel %vm889, %v886, %v878
    %v892 = vsel %vm889, %v887, %v879
    %v893 = vsel %vm889, %v888, %v880
    %vm894 = vcmask 523264
    %895 = vst.msk [vmem:[#allocation11] sm:$0xff] %vm894, %v890
    %896 = vst.msk [vmem:[#allocation11 + $0x8] sm:$0xff] %vm894, %v891
    %897 = vst.msk [vmem:[#allocation11 + $0x10] sm:$0xff] %vm894, %v892
    %898 = vst.msk [vmem:[#allocation11 + $0x18] sm:$0xff] %vm894, %v893
    %v899 = vmul.f32 %v280, %v280
    %v900 = vmul.f32 %v283, %v283
    %v901 = vmul.f32 %v286, %v286
    %v902 = vmul.f32 %v289, %v289
    %v903 = vsel %vm328, %v899, 0.0
    %904 = vadd.xlane.f32.xlu0 %v903
    %v905 = vpop.xlane.xlu0 %904
    %v906 = vsel %vm328, %v900, 0.0
    %907 = vadd.xlane.f32.xlu0 %v906
    %v908 = vpop.xlane.xlu0 %907
    %v909 = vsel %vm328, %v901, 0.0
    %910 = vadd.xlane.f32.xlu0 %v909
    %v911 = vpop.xlane.xlu0 %910
    %v912 = vsel %vm328, %v902, 0.0
    %913 = vadd.xlane.f32.xlu0 %v912
    %v914 = vpop.xlane.xlu0 %913
    %v915 = vrsqrt.pop %v905
    %v916 = vmul.f32 %v915, %v905
    %v917 = vmul.f32 %v916, %v915
    %v918 = vmul.f32 0.5, %v917
    %v919 = vsub.f32 1.5, %v918
    %v920 = vmul.f32 %v915, %v919
    %v921 = vmul.f32 %v905, %v920
    %vm922 = vcmp.eq.f32.partialorder %v905, inf
    %v923 = vsel %vm922, %v905, %v921
    %vm924 = vcmp.eq.f32.partialorder %v905, 0.0
    %v925 = vand.u32 %v905, 2147483648
    %v926 = vsel %vm924, %v925, %v923
    %v927 = vrsqrt.pop %v908
    %v928 = vmul.f32 %v927, %v908
    %v929 = vmul.f32 %v928, %v927
    %v930 = vmul.f32 0.5, %v929
    %v931 = vsub.f32 1.5, %v930
    %v932 = vmul.f32 %v927, %v931
    %v933 = vmul.f32 %v908, %v932
    %vm934 = vcmp.eq.f32.partialorder %v908, inf
    %v935 = vsel %vm934, %v908, %v933
    %vm936 = vcmp.eq.f32.partialorder %v908, 0.0
    %v937 = vand.u32 %v908, 2147483648
    %v938 = vsel %vm936, %v937, %v935
    %v939 = vrsqrt.pop %v911
    %v940 = vmul.f32 %v939, %v911
    %v941 = vmul.f32 %v940, %v939
    %v942 = vmul.f32 0.5, %v941
    %v943 = vsub.f32 1.5, %v942
    %v944 = vmul.f32 %v939, %v943
    %v945 = vmul.f32 %v911, %v944
    %vm946 = vcmp.eq.f32.partialorder %v911, inf
    %v947 = vsel %vm946, %v911, %v945
    %vm948 = vcmp.eq.f32.partialorder %v911, 0.0
    %v949 = vand.u32 %v911, 2147483648
    %v950 = vsel %vm948, %v949, %v947
    %v951 = vrsqrt.pop %v914
    %v952 = vmul.f32 %v951, %v914
    %v953 = vmul.f32 %v952, %v951
    %v954 = vmul.f32 0.5, %v953
    %v955 = vsub.f32 1.5, %v954
    %v956 = vmul.f32 %v951, %v955
    %v957 = vmul.f32 %v914, %v956
    %vm958 = vcmp.eq.f32.partialorder %v914, inf
    %v959 = vsel %vm958, %v914, %v957
    %vm960 = vcmp.eq.f32.partialorder %v914, 0.0
    %v961 = vand.u32 %v914, 2147483648
    %v962 = vsel %vm960, %v961, %v959
    %v963 = vmax.f32 %v926, 1e-12
    %v964 = vmax.f32 %v938, 1e-12
    %v965 = vmax.f32 %v950, 1e-12
    %v966 = vmax.f32 %v962, 1e-12
    %v967 = vrcp.pop %v963
    %v968 = vmul.f32 %v963, %v967
    %v969 = vsub.f32 1.0, %v968
    %v970 = vmul.f32 %v967, %v969
    %v971 = vadd.f32 %v967, %v970
    %vm972 = vweird.f32 %v963
    %vm973 = vweird.f32 %v967
    %vm974 = vmor %vm972, %vm973
    %v975 = vsel %vm974, %v967, %v971
    %v976 = vand.u32 2147483647, %v963
    %vm977 = vcmp.eq.f32.partialorder %v976, 8.507059e+37
    %v978 = vand.u32 %v963, 2147483648
    %v979 = vor.u32 1.1754944e-38, %v978
    %v980 = vsel %vm977, %v979, %v975
    %v981 = vmul.f32 1.0, %v980
    %v982 = vrcp.pop %v964
    %v983 = vmul.f32 %v964, %v982
    %v984 = vsub.f32 1.0, %v983
    %v985 = vmul.f32 %v982, %v984
    %v986 = vadd.f32 %v982, %v985
    %vm987 = vweird.f32 %v964
    %vm988 = vweird.f32 %v982
    %vm989 = vmor %vm987, %vm988
    %v990 = vsel %vm989, %v982, %v986
    %v991 = vand.u32 2147483647, %v964
    %vm992 = vcmp.eq.f32.partialorder %v991, 8.507059e+37
    %v993 = vand.u32 %v964, 2147483648
    %v994 = vor.u32 1.1754944e-38, %v993
    %v995 = vsel %vm992, %v994, %v990
    %v996 = vmul.f32 1.0, %v995
    %v997 = vrcp.pop %v965
    %v998 = vmul.f32 %v965, %v997
    %v999 = vsub.f32 1.0, %v998
    %v1000 = vmul.f32 %v997, %v999
    %v1001 = vadd.f32 %v997, %v1000
    %vm1002 = vweird.f32 %v965
    %vm1003 = vweird.f32 %v997
    %vm1004 = vmor %vm1002, %vm1003
    %v1005 = vsel %vm1004, %v997, %v1001
    %v1006 = vand.u32 2147483647, %v965
    %vm1007 = vcmp.eq.f32.partialorder %v1006, 8.507059e+37
    %v1008 = vand.u32 %v965, 2147483648
    %v1009 = vor.u32 1.1754944e-38, %v1008
    %v1010 = vsel %vm1007, %v1009, %v1005
    %v1011 = vmul.f32 1.0, %v1010
    %v1012 = vrcp.pop %v966
    %v1013 = vmul.f32 %v966, %v1012
    %v1014 = vsub.f32 1.0, %v1013
    %v1015 = vmul.f32 %v1012, %v1014
    %v1016 = vadd.f32 %v1012, %v1015
    %vm1017 = vweird.f32 %v966
    %vm1018 = vweird.f32 %v1012
    %vm1019 = vmor %vm1017, %vm1018
    %v1020 = vsel %vm1019, %v1012, %v1016
    %v1021 = vand.u32 2147483647, %v966
    %vm1022 = vcmp.eq.f32.partialorder %v1021, 8.507059e+37
    %v1023 = vand.u32 %v966, 2147483648
    %v1024 = vor.u32 1.1754944e-38, %v1023
    %v1025 = vsel %vm1022, %v1024, %v1020
    %v1026 = vmul.f32 1.0, %v1025
    %v1027 = vmul.f32 %v280, %v981
    %v1028 = vmul.f32 %v283, %v996
    %v1029 = vmul.f32 %v286, %v1011
    %v1030 = vmul.f32 %v289, %v1026
    %1035 = vrot.lane.b32.xlu0 %v899, 112
    %v1036 = vpop.permute.xlu0 %1035
    %1037 = vrot.lane.b32.xlu0 %v900, 112
    %v1038 = vpop.permute.xlu0 %1037
    %1039 = vrot.lane.b32.xlu0 %v901, 112
    %v1040 = vpop.permute.xlu0 %1039
    %1041 = vrot.lane.b32.xlu0 %v902, 112
    %v1042 = vpop.permute.xlu0 %1041
    %v1047 = vsel %vm328, %v1036, 0.0
    %1048 = vadd.xlane.f32.xlu0 %v1047
    %v1049 = vpop.xlane.xlu0 %1048
    %v1050 = vsel %vm328, %v1038, 0.0
    %1051 = vadd.xlane.f32.xlu0 %v1050
    %v1052 = vpop.xlane.xlu0 %1051
    %v1053 = vsel %vm328, %v1040, 0.0
    %1054 = vadd.xlane.f32.xlu0 %v1053
    %v1055 = vpop.xlane.xlu0 %1054
    %v1056 = vsel %vm328, %v1042, 0.0
    %1057 = vadd.xlane.f32.xlu0 %v1056
    %v1058 = vpop.xlane.xlu0 %1057
    %v1059 = vrsqrt.pop %v1049
    %v1060 = vmul.f32 %v1059, %v1049
    %v1061 = vmul.f32 %v1060, %v1059
    %v1062 = vmul.f32 0.5, %v1061
    %v1063 = vsub.f32 1.5, %v1062
    %v1064 = vmul.f32 %v1059, %v1063
    %v1065 = vmul.f32 %v1049, %v1064
    %vm1066 = vcmp.eq.f32.partialorder %v1049, inf
    %v1067 = vsel %vm1066, %v1049, %v1065
    %vm1068 = vcmp.eq.f32.partialorder %v1049, 0.0
    %v1069 = vand.u32 %v1049, 2147483648
    %v1070 = vsel %vm1068, %v1069, %v1067
    %v1071 = vrsqrt.pop %v1052
    %v1072 = vmul.f32 %v1071, %v1052
    %v1073 = vmul.f32 %v1072, %v1071
    %v1074 = vmul.f32 0.5, %v1073
    %v1075 = vsub.f32 1.5, %v1074
    %v1076 = vmul.f32 %v1071, %v1075
    %v1077 = vmul.f32 %v1052, %v1076
    %vm1078 = vcmp.eq.f32.partialorder %v1052, inf
    %v1079 = vsel %vm1078, %v1052, %v1077
    %vm1080 = vcmp.eq.f32.partialorder %v1052, 0.0
    %v1081 = vand.u32 %v1052, 2147483648
    %v1082 = vsel %vm1080, %v1081, %v1079
    %v1083 = vrsqrt.pop %v1055
    %v1084 = vmul.f32 %v1083, %v1055
    %v1085 = vmul.f32 %v1084, %v1083
    %v1086 = vmul.f32 0.5, %v1085
    %v1087 = vsub.f32 1.5, %v1086
    %v1088 = vmul.f32 %v1083, %v1087
    %v1089 = vmul.f32 %v1055, %v1088
    %vm1090 = vcmp.eq.f32.partialorder %v1055, inf
    %v1091 = vsel %vm1090, %v1055, %v1089
    %vm1092 = vcmp.eq.f32.partialorder %v1055, 0.0
    %v1093 = vand.u32 %v1055, 2147483648
    %v1094 = vsel %vm1092, %v1093, %v1091
    %v1095 = vrsqrt.pop %v1058
    %v1096 = vmul.f32 %v1095, %v1058
    %v1097 = vmul.f32 %v1096, %v1095
    %v1098 = vmul.f32 0.5, %v1097
    %v1099 = vsub.f32 1.5, %v1098
    %v1100 = vmul.f32 %v1095, %v1099
    %v1101 = vmul.f32 %v1058, %v1100
    %vm1102 = vcmp.eq.f32.partialorder %v1058, inf
    %v1103 = vsel %vm1102, %v1058, %v1101
    %vm1104 = vcmp.eq.f32.partialorder %v1058, 0.0
    %v1105 = vand.u32 %v1058, 2147483648
    %v1106 = vsel %vm1104, %v1105, %v1103
    %v1107 = vmax.f32 %v1070, 1e-12
    %v1108 = vmax.f32 %v1082, 1e-12
    %v1109 = vmax.f32 %v1094, 1e-12
    %v1110 = vmax.f32 %v1106, 1e-12
    %v1111 = vrcp.pop %v1107
    %v1112 = vmul.f32 %v1107, %v1111
    %v1113 = vsub.f32 1.0, %v1112
    %v1114 = vmul.f32 %v1111, %v1113
    %v1115 = vadd.f32 %v1111, %v1114
    %vm1116 = vweird.f32 %v1107
    %vm1117 = vweird.f32 %v1111
    %vm1118 = vmor %vm1116, %vm1117
    %v1119 = vsel %vm1118, %v1111, %v1115
    %v1120 = vand.u32 2147483647, %v1107
    %vm1121 = vcmp.eq.f32.partialorder %v1120, 8.507059e+37
    %v1122 = vand.u32 %v1107, 2147483648
    %v1123 = vor.u32 1.1754944e-38, %v1122
    %v1124 = vsel %vm1121, %v1123, %v1119
    %v1125 = vmul.f32 1.0, %v1124
    %v1126 = vrcp.pop %v1108
    %v1127 = vmul.f32 %v1108, %v1126
    %v1128 = vsub.f32 1.0, %v1127
    %v1129 = vmul.f32 %v1126, %v1128
    %v1130 = vadd.f32 %v1126, %v1129
    %vm1131 = vweird.f32 %v1108
    %vm1132 = vweird.f32 %v1126
    %vm1133 = vmor %vm1131, %vm1132
    %v1134 = vsel %vm1133, %v1126, %v1130
    %v1135 = vand.u32 2147483647, %v1108
    %vm1136 = vcmp.eq.f32.partialorder %v1135, 8.507059e+37
    %v1137 = vand.u32 %v1108, 2147483648
    %v1138 = vor.u32 1.1754944e-38, %v1137
    %v1139 = vsel %vm1136, %v1138, %v1134
    %v1140 = vmul.f32 1.0, %v1139
    %v1141 = vrcp.pop %v1109
    %v1142 = vmul.f32 %v1109, %v1141
    %v1143 = vsub.f32 1.0, %v1142
    %v1144 = vmul.f32 %v1141, %v1143
    %v1145 = vadd.f32 %v1141, %v1144
    %vm1146 = vweird.f32 %v1109
    %vm1147 = vweird.f32 %v1141
    %vm1148 = vmor %vm1146, %vm1147
    %v1149 = vsel %vm1148, %v1141, %v1145
    %v1150 = vand.u32 2147483647, %v1109
    %vm1151 = vcmp.eq.f32.partialorder %v1150, 8.507059e+37
    %v1152 = vand.u32 %v1109, 2147483648
    %v1153 = vor.u32 1.1754944e-38, %v1152
    %v1154 = vsel %vm1151, %v1153, %v1149
    %v1155 = vmul.f32 1.0, %v1154
    %v1156 = vrcp.pop %v1110
    %v1157 = vmul.f32 %v1110, %v1156
    %v1158 = vsub.f32 1.0, %v1157
    %v1159 = vmul.f32 %v1156, %v1158
    %v1160 = vadd.f32 %v1156, %v1159
    %vm1161 = vweird.f32 %v1110
    %vm1162 = vweird.f32 %v1156
    %vm1163 = vmor %vm1161, %vm1162
    %v1164 = vsel %vm1163, %v1156, %v1160
    %v1165 = vand.u32 2147483647, %v1110
    %vm1166 = vcmp.eq.f32.partialorder %v1165, 8.507059e+37
    %v1167 = vand.u32 %v1110, 2147483648
    %v1168 = vor.u32 1.1754944e-38, %v1167
    %v1169 = vsel %vm1166, %v1168, %v1164
    %v1170 = vmul.f32 1.0, %v1169
    %v1171 = vmul.f32 %v280, %v1125
    %v1172 = vmul.f32 %v283, %v1140
    %v1173 = vmul.f32 %v286, %v1155
    %v1174 = vmul.f32 %v289, %v1170
    %1175 = vrot.lane.b32.xlu0 %v899, 96
    %v1176 = vpop.permute.xlu0 %1175
    %1177 = vrot.lane.b32.xlu0 %v900, 96
    %v1178 = vpop.permute.xlu0 %1177
    %1179 = vrot.lane.b32.xlu0 %v901, 96
    %v1180 = vpop.permute.xlu0 %1179
    %1181 = vrot.lane.b32.xlu0 %v902, 96
    %v1182 = vpop.permute.xlu0 %1181
    %v1187 = vsel %vm328, %v1176, 0.0
    %1188 = vadd.xlane.f32.xlu0 %v1187
    %v1189 = vpop.xlane.xlu0 %1188
    %v1190 = vsel %vm328, %v1178, 0.0
    %1191 = vadd.xlane.f32.xlu0 %v1190
    %v1192 = vpop.xlane.xlu0 %1191
    %v1193 = vsel %vm328, %v1180, 0.0
    %1194 = vadd.xlane.f32.xlu0 %v1193
    %v1195 = vpop.xlane.xlu0 %1194
    %v1196 = vsel %vm328, %v1182, 0.0
    %1197 = vadd.xlane.f32.xlu0 %v1196
    %v1198 = vpop.xlane.xlu0 %1197
    %v1199 = vrsqrt.pop %v1189
    %v1200 = vmul.f32 %v1199, %v1189
    %v1201 = vmul.f32 %v1200, %v1199
    %v1202 = vmul.f32 0.5, %v1201
    %v1203 = vsub.f32 1.5, %v1202
    %v1204 = vmul.f32 %v1199, %v1203
    %v1205 = vmul.f32 %v1189, %v1204
    %vm1206 = vcmp.eq.f32.partialorder %v1189, inf
    %v1207 = vsel %vm1206, %v1189, %v1205
    %vm1208 = vcmp.eq.f32.partialorder %v1189, 0.0
    %v1209 = vand.u32 %v1189, 2147483648
    %v1210 = vsel %vm1208, %v1209, %v1207
    %v1211 = vrsqrt.pop %v1192
    %v1212 = vmul.f32 %v1211, %v1192
    %v1213 = vmul.f32 %v1212, %v1211
    %v1214 = vmul.f32 0.5, %v1213
    %v1215 = vsub.f32 1.5, %v1214
    %v1216 = vmul.f32 %v1211, %v1215
    %v1217 = vmul.f32 %v1192, %v1216
    %vm1218 = vcmp.eq.f32.partialorder %v1192, inf
    %v1219 = vsel %vm1218, %v1192, %v1217
    %vm1220 = vcmp.eq.f32.partialorder %v1192, 0.0
    %v1221 = vand.u32 %v1192, 2147483648
    %v1222 = vsel %vm1220, %v1221, %v1219
    %v1223 = vrsqrt.pop %v1195
    %v1224 = vmul.f32 %v1223, %v1195
    %v1225 = vmul.f32 %v1224, %v1223
    %v1226 = vmul.f32 0.5, %v1225
    %v1227 = vsub.f32 1.5, %v1226
    %v1228 = vmul.f32 %v1223, %v1227
    %v1229 = vmul.f32 %v1195, %v1228
    %vm1230 = vcmp.eq.f32.partialorder %v1195, inf
    %v1231 = vsel %vm1230, %v1195, %v1229
    %vm1232 = vcmp.eq.f32.partialorder %v1195, 0.0
    %v1233 = vand.u32 %v1195, 2147483648
    %v1234 = vsel %vm1232, %v1233, %v1231
    %v1235 = vrsqrt.pop %v1198
    %v1236 = vmul.f32 %v1235, %v1198
    %v1237 = vmul.f32 %v1236, %v1235
    %v1238 = vmul.f32 0.5, %v1237
    %v1239 = vsub.f32 1.5, %v1238
    %v1240 = vmul.f32 %v1235, %v1239
    %v1241 = vmul.f32 %v1198, %v1240
    %vm1242 = vcmp.eq.f32.partialorder %v1198, inf
    %v1243 = vsel %vm1242, %v1198, %v1241
    %vm1244 = vcmp.eq.f32.partialorder %v1198, 0.0
    %v1245 = vand.u32 %v1198, 2147483648
    %v1246 = vsel %vm1244, %v1245, %v1243
    %v1247 = vmax.f32 %v1210, 1e-12
    %v1248 = vmax.f32 %v1222, 1e-12
    %v1249 = vmax.f32 %v1234, 1e-12
    %v1250 = vmax.f32 %v1246, 1e-12
    %v1251 = vrcp.pop %v1247
    %v1252 = vmul.f32 %v1247, %v1251
    %v1253 = vsub.f32 1.0, %v1252
    %v1254 = vmul.f32 %v1251, %v1253
    %v1255 = vadd.f32 %v1251, %v1254
    %vm1256 = vweird.f32 %v1247
    %vm1257 = vweird.f32 %v1251
    %vm1258 = vmor %vm1256, %vm1257
    %v1259 = vsel %vm1258, %v1251, %v1255
    %v1260 = vand.u32 2147483647, %v1247
    %vm1261 = vcmp.eq.f32.partialorder %v1260, 8.507059e+37
    %v1262 = vand.u32 %v1247, 2147483648
    %v1263 = vor.u32 1.1754944e-38, %v1262
    %v1264 = vsel %vm1261, %v1263, %v1259
    %v1265 = vmul.f32 1.0, %v1264
    %v1266 = vrcp.pop %v1248
    %v1267 = vmul.f32 %v1248, %v1266
    %v1268 = vsub.f32 1.0, %v1267
    %v1269 = vmul.f32 %v1266, %v1268
    %v1270 = vadd.f32 %v1266, %v1269
    %vm1271 = vweird.f32 %v1248
    %vm1272 = vweird.f32 %v1266
    %vm1273 = vmor %vm1271, %vm1272
    %v1274 = vsel %vm1273, %v1266, %v1270
    %v1275 = vand.u32 2147483647, %v1248
    %vm1276 = vcmp.eq.f32.partialorder %v1275, 8.507059e+37
    %v1277 = vand.u32 %v1248, 2147483648
    %v1278 = vor.u32 1.1754944e-38, %v1277
    %v1279 = vsel %vm1276, %v1278, %v1274
    %v1280 = vmul.f32 1.0, %v1279
    %v1281 = vrcp.pop %v1249
    %v1282 = vmul.f32 %v1249, %v1281
    %v1283 = vsub.f32 1.0, %v1282
    %v1284 = vmul.f32 %v1281, %v1283
    %v1285 = vadd.f32 %v1281, %v1284
    %vm1286 = vweird.f32 %v1249
    %vm1287 = vweird.f32 %v1281
    %vm1288 = vmor %vm1286, %vm1287
    %v1289 = vsel %vm1288, %v1281, %v1285
    %v1290 = vand.u32 2147483647, %v1249
    %vm1291 = vcmp.eq.f32.partialorder %v1290, 8.507059e+37
    %v1292 = vand.u32 %v1249, 2147483648
    %v1293 = vor.u32 1.1754944e-38, %v1292
    %v1294 = vsel %vm1291, %v1293, %v1289
    %v1295 = vmul.f32 1.0, %v1294
    %v1296 = vrcp.pop %v1250
    %v1297 = vmul.f32 %v1250, %v1296
    %v1298 = vsub.f32 1.0, %v1297
    %v1299 = vmul.f32 %v1296, %v1298
    %v1300 = vadd.f32 %v1296, %v1299
    %vm1301 = vweird.f32 %v1250
    %vm1302 = vweird.f32 %v1296
    %vm1303 = vmor %vm1301, %vm1302
    %v1304 = vsel %vm1303, %v1296, %v1300
    %v1305 = vand.u32 2147483647, %v1250
    %vm1306 = vcmp.eq.f32.partialorder %v1305, 8.507059e+37
    %v1307 = vand.u32 %v1250, 2147483648
    %v1308 = vor.u32 1.1754944e-38, %v1307
    %v1309 = vsel %vm1306, %v1308, %v1304
    %v1310 = vmul.f32 1.0, %v1309
    %v1311 = vmul.f32 %v280, %v1265
    %v1312 = vmul.f32 %v283, %v1280
    %v1313 = vmul.f32 %v286, %v1295
    %v1314 = vmul.f32 %v289, %v1310
    %1315 = vrot.lane.b32.xlu0 %v899, 80
    %v1316 = vpop.permute.xlu0 %1315
    %1317 = vrot.lane.b32.xlu0 %v900, 80
    %v1318 = vpop.permute.xlu0 %1317
    %1319 = vrot.lane.b32.xlu0 %v901, 80
    %v1320 = vpop.permute.xlu0 %1319
    %1321 = vrot.lane.b32.xlu0 %v902, 80
    %v1322 = vpop.permute.xlu0 %1321
    %v1327 = vsel %vm328, %v1316, 0.0
    %1328 = vadd.xlane.f32.xlu0 %v1327
    %v1329 = vpop.xlane.xlu0 %1328
    %v1330 = vsel %vm328, %v1318, 0.0
    %1331 = vadd.xlane.f32.xlu0 %v1330
    %v1332 = vpop.xlane.xlu0 %1331
    %v1333 = vsel %vm328, %v1320, 0.0
    %1334 = vadd.xlane.f32.xlu0 %v1333
    %v1335 = vpop.xlane.xlu0 %1334
    %v1336 = vsel %vm328, %v1322, 0.0
    %1337 = vadd.xlane.f32.xlu0 %v1336
    %v1338 = vpop.xlane.xlu0 %1337
    %v1339 = vrsqrt.pop %v1329
    %v1340 = vmul.f32 %v1339, %v1329
    %v1341 = vmul.f32 %v1340, %v1339
    %v1342 = vmul.f32 0.5, %v1341
    %v1343 = vsub.f32 1.5, %v1342
    %v1344 = vmul.f32 %v1339, %v1343
    %v1345 = vmul.f32 %v1329, %v1344
    %vm1346 = vcmp.eq.f32.partialorder %v1329, inf
    %v1347 = vsel %vm1346, %v1329, %v1345
    %vm1348 = vcmp.eq.f32.partialorder %v1329, 0.0
    %v1349 = vand.u32 %v1329, 2147483648
    %v1350 = vsel %vm1348, %v1349, %v1347
    %v1351 = vrsqrt.pop %v1332
    %v1352 = vmul.f32 %v1351, %v1332
    %v1353 = vmul.f32 %v1352, %v1351
    %v1354 = vmul.f32 0.5, %v1353
    %v1355 = vsub.f32 1.5, %v1354
    %v1356 = vmul.f32 %v1351, %v1355
    %v1357 = vmul.f32 %v1332, %v1356
    %vm1358 = vcmp.eq.f32.partialorder %v1332, inf
    %v1359 = vsel %vm1358, %v1332, %v1357
    %vm1360 = vcmp.eq.f32.partialorder %v1332, 0.0
    %v1361 = vand.u32 %v1332, 2147483648
    %v1362 = vsel %vm1360, %v1361, %v1359
    %v1363 = vrsqrt.pop %v1335
    %v1364 = vmul.f32 %v1363, %v1335
    %v1365 = vmul.f32 %v1364, %v1363
    %v1366 = vmul.f32 0.5, %v1365
    %v1367 = vsub.f32 1.5, %v1366
    %v1368 = vmul.f32 %v1363, %v1367
    %v1369 = vmul.f32 %v1335, %v1368
    %vm1370 = vcmp.eq.f32.partialorder %v1335, inf
    %v1371 = vsel %vm1370, %v1335, %v1369
    %vm1372 = vcmp.eq.f32.partialorder %v1335, 0.0
    %v1373 = vand.u32 %v1335, 2147483648
    %v1374 = vsel %vm1372, %v1373, %v1371
    %v1375 = vrsqrt.pop %v1338
    %v1376 = vmul.f32 %v1375, %v1338
    %v1377 = vmul.f32 %v1376, %v1375
    %v1378 = vmul.f32 0.5, %v1377
    %v1379 = vsub.f32 1.5, %v1378
    %v1380 = vmul.f32 %v1375, %v1379
    %v1381 = vmul.f32 %v1338, %v1380
    %vm1382 = vcmp.eq.f32.partialorder %v1338, inf
    %v1383 = vsel %vm1382, %v1338, %v1381
    %vm1384 = vcmp.eq.f32.partialorder %v1338, 0.0
    %v1385 = vand.u32 %v1338, 2147483648
    %v1386 = vsel %vm1384, %v1385, %v1383
    %v1387 = vmax.f32 %v1350, 1e-12
    %v1388 = vmax.f32 %v1362, 1e-12
    %v1389 = vmax.f32 %v1374, 1e-12
    %v1390 = vmax.f32 %v1386, 1e-12
    %v1391 = vrcp.pop %v1387
    %v1392 = vmul.f32 %v1387, %v1391
    %v1393 = vsub.f32 1.0, %v1392
    %v1394 = vmul.f32 %v1391, %v1393
    %v1395 = vadd.f32 %v1391, %v1394
    %vm1396 = vweird.f32 %v1387
    %vm1397 = vweird.f32 %v1391
    %vm1398 = vmor %vm1396, %vm1397
    %v1399 = vsel %vm1398, %v1391, %v1395
    %v1400 = vand.u32 2147483647, %v1387
    %vm1401 = vcmp.eq.f32.partialorder %v1400, 8.507059e+37
    %v1402 = vand.u32 %v1387, 2147483648
    %v1403 = vor.u32 1.1754944e-38, %v1402
    %v1404 = vsel %vm1401, %v1403, %v1399
    %v1405 = vmul.f32 1.0, %v1404
    %v1406 = vrcp.pop %v1388
    %v1407 = vmul.f32 %v1388, %v1406
    %v1408 = vsub.f32 1.0, %v1407
    %v1409 = vmul.f32 %v1406, %v1408
    %v1410 = vadd.f32 %v1406, %v1409
    %vm1411 = vweird.f32 %v1388
    %vm1412 = vweird.f32 %v1406
    %vm1413 = vmor %vm1411, %vm1412
    %v1414 = vsel %vm1413, %v1406, %v1410
    %v1415 = vand.u32 2147483647, %v1388
    %vm1416 = vcmp.eq.f32.partialorder %v1415, 8.507059e+37
    %v1417 = vand.u32 %v1388, 2147483648
    %v1418 = vor.u32 1.1754944e-38, %v1417
    %v1419 = vsel %vm1416, %v1418, %v1414
    %v1420 = vmul.f32 1.0, %v1419
    %v1421 = vrcp.pop %v1389
    %v1422 = vmul.f32 %v1389, %v1421
    %v1423 = vsub.f32 1.0, %v1422
    %v1424 = vmul.f32 %v1421, %v1423
    %v1425 = vadd.f32 %v1421, %v1424
    %vm1426 = vweird.f32 %v1389
    %vm1427 = vweird.f32 %v1421
    %vm1428 = vmor %vm1426, %vm1427
    %v1429 = vsel %vm1428, %v1421, %v1425
    %v1430 = vand.u32 2147483647, %v1389
    %vm1431 = vcmp.eq.f32.partialorder %v1430, 8.507059e+37
    %v1432 = vand.u32 %v1389, 2147483648
    %v1433 = vor.u32 1.1754944e-38, %v1432
    %v1434 = vsel %vm1431, %v1433, %v1429
    %v1435 = vmul.f32 1.0, %v1434
    %v1436 = vrcp.pop %v1390
    %v1437 = vmul.f32 %v1390, %v1436
    %v1438 = vsub.f32 1.0, %v1437
    %v1439 = vmul.f32 %v1436, %v1438
    %v1440 = vadd.f32 %v1436, %v1439
    %vm1441 = vweird.f32 %v1390
    %vm1442 = vweird.f32 %v1436
    %vm1443 = vmor %vm1441, %vm1442
    %v1444 = vsel %vm1443, %v1436, %v1440
    %v1445 = vand.u32 2147483647, %v1390
    %vm1446 = vcmp.eq.f32.partialorder %v1445, 8.507059e+37
    %v1447 = vand.u32 %v1390, 2147483648
    %v1448 = vor.u32 1.1754944e-38, %v1447
    %v1449 = vsel %vm1446, %v1448, %v1444
    %v1450 = vmul.f32 1.0, %v1449
    %v1451 = vmul.f32 %v280, %v1405
    %v1452 = vmul.f32 %v283, %v1420
    %v1453 = vmul.f32 %v286, %v1435
    %v1454 = vmul.f32 %v289, %v1450
    %v1455 = vsel %vm328, %v1027, %v1171
    %v1456 = vsel %vm328, %v1028, %v1172
    %v1457 = vsel %vm328, %v1029, %v1173
    %v1458 = vsel %vm328, %v1030, %v1174
    %v1459 = vsel %vm106, %v1455, %v1311
    %v1460 = vsel %vm106, %v1456, %v1312
    %v1461 = vsel %vm106, %v1457, %v1313
    %v1462 = vsel %vm106, %v1458, %v1314
    %v1463 = vsel %vm889, %v1459, %v1451
    %v1464 = vsel %vm889, %v1460, %v1452
    %v1465 = vsel %vm889, %v1461, %v1453
    %v1466 = vsel %vm889, %v1462, %v1454
    %1467 = vst.msk [vmem:[#allocation12] sm:$0xff] %vm894, %v1463
    %1468 = vst.msk [vmem:[#allocation12 + $0x8] sm:$0xff] %vm894, %v1464
    %1469 = vst.msk [vmem:[#allocation12 + $0x10] sm:$0xff] %vm894, %v1465
    %1470 = vst.msk [vmem:[#allocation12 + $0x18] sm:$0xff] %vm894, %v1466
    %1471 = vst.msk [vmem:[#allocation14] sm:$0xff] %vm894, %v313
    %1472 = vst.msk [vmem:[#allocation14 + $0x8] sm:$0xff] %vm894, %v316
    %1473 = vst.msk [vmem:[#allocation14 + $0x10] sm:$0xff] %vm894, %v319
    %1474 = vst.msk [vmem:[#allocation14 + $0x18] sm:$0xff] %vm894, %v322
    // Predicated region
    $region42: #{tpu_custom_call.1} parent=1 // pred_check
      _
    $region43: #{tpu_custom_call.1} parent=1 // pred_check_branch
      %1476 = sbr.rel (0) target = $region45
    $region44: #{tpu_custom_call.1} parent=1 // pred_region
      %1478 = vsyncadd [#allocation4], 0
      %s1479 = sshll.u32 [#allocation11], 4
      %s1480 = int_to_ptr.vmem [resolvable:$true] %s1479
      %s1481 = sshll.u32 %s5, 4
      %s1482 = int_to_ptr.hbm [resolvable:$true] %s1481
      %1487 = dma.vmem_to_hbm [thread:$0]  %s1480, 512, %s1482, [#allocation4], 128, 128, 8
    $region45: #{tpu_custom_call.1} parent=1 // pred_fallthru
      _
    // Predicated region
    $region46: #{tpu_custom_call.1} parent=1 // pred_check
      _
    $region47: #{tpu_custom_call.1} parent=1 // pred_check_branch
      %1489 = sbr.rel (0) target = $region49
    $region48: #{tpu_custom_call.1} parent=1 // pred_region
      %1491 = vsyncadd [#allocation13], 0
      %s1492 = sshll.u32 [#allocation12], 4
      %s1493 = int_to_ptr.vmem [resolvable:$true] %s1492
      %s1494 = sshll.u32 %s6, 4
      %s1495 = int_to_ptr.hbm [resolvable:$true] %s1494
      %1500 = dma.vmem_to_hbm [thread:$0]  %s1493, 512, %s1495, [#allocation13], 128, 128, 8
    $region49: #{tpu_custom_call.1} parent=1 // pred_fallthru
      _
    // Predicated region
    $region50: #{tpu_custom_call.1} parent=1 // pred_check
      _
    $region51: #{tpu_custom_call.1} parent=1 // pred_check_branch
      %1502 = sbr.rel (0) target = $region53
    $region52: #{tpu_custom_call.1} parent=1 // pred_region
      %1504 = vsyncadd [#allocation13], 0
      %s1505 = sshll.u32 [#allocation14], 4
      %s1506 = int_to_ptr.vmem [resolvable:$true] %s1505
      %s1507 = sshll.u32 %s7, 4
      %s1508 = int_to_ptr.hbm [resolvable:$true] %s1507
      %1513 = dma.vmem_to_hbm [thread:$0]  %s1506, 512, %s1508, [#allocation13], 128, 128, 8
    $region53: #{tpu_custom_call.1} parent=1 // pred_fallthru
      _
    // Predicated region
    $region54: #{tpu_custom_call.1} parent=1 // pred_check
      _
    $region55: #{tpu_custom_call.1} parent=1 // pred_check_branch
      %1515 = sbr.rel (0) target = $region57
    $region56: #{tpu_custom_call.1} parent=1 // pred_region
      %1517 = dma.done [#allocation4], 512
    $region57: #{tpu_custom_call.1} parent=1 // pred_fallthru
      _
    // Predicated region
    $region58: #{tpu_custom_call.1} parent=1 // pred_check
      _
    $region59: #{tpu_custom_call.1} parent=1 // pred_check_branch
      %1519 = sbr.rel (0) target = $region61
    $region60: #{tpu_custom_call.1} parent=1 // pred_region
      %1521 = dma.done [#allocation13], 512
    $region61: #{tpu_custom_call.1} parent=1 // pred_fallthru
      _
    // Predicated region
    $region62: #{tpu_custom_call.1} parent=1 // pred_check
      _
    $region63: #{tpu_custom_call.1} parent=1 // pred_check_branch
      %1523 = sbr.rel (0) target = $region65
    $region64: #{tpu_custom_call.1} parent=1 // pred_region
      %1525 = dma.done [#allocation13], 512
    $region65: #{tpu_custom_call.1} parent=1 // pred_fallthru
      _
    %1526 = vsyncpa [#allocation3], 1
    %1527 = vsyncpa [#allocation6], 1
    %1528 = vsyncpa [#allocation9], 1
    %1529 = vsyncpa [#allocation4], 1
    %1530 = vsyncpa [#allocation13], 1

</llo_original>
